<compile_context>
chip_gen: v6e
topology: v6e:2x2x1
jax: 0.10.0
libtpu: 0.0.40
codegen_flags: <defaults>
</compile_context>

<pallas_src>
import jax
import jax.numpy as jnp
from jax.experimental import pallas as pl
from jax.experimental.pallas import tpu as pltpu

EPS = 1e-4           # matches nn.BatchNorm1d(eps=0.0001)
IN_FEATURES = 784    # fixed by x.view(-1, 28*28)
N_PAD = 128          # lane-dense logits width (>= out_features)
NEG_INF = -1e30      # bias for padded logit lanes


def _bn_fused(h, gamma, beta):
    """Training-mode BatchNorm1d folded into one scale/shift over f32 h."""
    mean = jnp.mean(h, axis=0, keepdims=True)
    ex2 = jnp.mean(h * h, axis=0, keepdims=True)
    var = ex2 - mean * mean                       # biased batch variance
    s = gamma * jax.lax.rsqrt(var + EPS)
    t = beta - mean * s
    return h * s + t


def fc_kernel(x_ref, w1_ref, w2_hbm, w3_hbm, w4_hbm, vec_ref, o_ref,
              w2_buf, w3_buf, w4_buf, sem):
    n_pad = o_ref.shape[-1]

    # Kick off the later-layer weight DMAs immediately so they overlap the
    # layer-1/2 matmuls and BN passes (w1 arrives via the BlockSpec prologue).
    cp2 = pltpu.make_async_copy(w2_hbm, w2_buf, sem.at[0])
    cp3 = pltpu.make_async_copy(w3_hbm, w3_buf, sem.at[1])
    cp4 = pltpu.make_async_copy(w4_hbm, w4_buf, sem.at[2])
    cp2.start()
    cp3.start()
    cp4.start()

    # Unpack the consolidated per-feature vectors (all f32, shape (1, U)).
    vec = vec_ref[...]
    b1, g1, be1 = vec[0:1, :], vec[1:2, :], vec[2:3, :]
    b2, g2, be2 = vec[3:4, :], vec[4:5, :], vec[5:6, :]
    b3, g3, be3 = vec[6:7, :], vec[7:8, :], vec[8:9, :]
    b4 = vec[9:10, :n_pad]        # padded lanes hold NEG_INF

    def layer(h_bf16, w_bf16, b, g, be):
        # bf16 x bf16 -> f32 on the MXU; everything after stays f32.
        z = jnp.dot(h_bf16, w_bf16, preferred_element_type=jnp.float32) + b
        z = jnp.maximum(z, 0.0)
        return _bn_fused(z, g, be)

    h = layer(x_ref[...], w1_ref[...], b1, g1, be1)          # x already bf16
    cp2.wait()
    h = layer(h.astype(jnp.bfloat16), w2_buf[...], b2, g2, be2)
    cp3.wait()
    h = layer(h.astype(jnp.bfloat16), w3_buf[...], b3, g3, be3)
    cp4.wait()

    # linear4 -> LogSoftmax(dim=1), max-stabilized, f32, over all 128 lanes
    # (padded lanes carry bias NEG_INF so they contribute exp(..) == 0).
    z = jnp.dot(h.astype(jnp.bfloat16), w4_buf[...],
                preferred_element_type=jnp.float32) + b4
    m = jnp.max(z, axis=-1, keepdims=True)
    lse = jnp.log(jnp.sum(jnp.exp(z - m), axis=-1, keepdims=True)) + m
    o_ref[...] = z - lse


def prepare_params(params, n_pad=N_PAD):
    """One-time weight preprocessing. Call once per model, NOT per forward."""
    num_units = params["w1"].shape[1]
    out_features = params["w4"].shape[1]
    assert num_units % 128 == 0 and num_units >= n_pad
    assert out_features <= n_pad

    w1 = params["w1"].astype(jnp.bfloat16)                  # (784, U)
    w2 = params["w2"].astype(jnp.bfloat16)                  # (U, U)
    w3 = params["w3"].astype(jnp.bfloat16)                  # (U, U)
    # Lane-dense final layer: zero weight columns for padded logits.
    w4 = jnp.pad(params["w4"],
                 ((0, 0), (0, n_pad - out_features))).astype(jnp.bfloat16)

    # b4 row: real bias in lanes [:out_features], NEG_INF in the padded lanes
    # so log-softmax ignores them; lanes >= n_pad are never read.
    b4_row = jnp.full((1, num_units), NEG_INF, jnp.float32)
    b4_row = b4_row.at[:, :out_features].set(params["b4"])

    vec = jnp.concatenate(
        [params["b1"], params["g1"], params["be1"],
         params["b2"], params["g2"], params["be2"],
         params["b3"], params["g3"], params["be3"],
         b4_row], axis=0)                                    # (10, U) f32

    return {"w1": w1, "w2": w2, "w3": w3, "w4": w4, "vec": vec}


def fc_forward(x_nchw, prep, out_features=10):
    n_pad = prep["w4"].shape[1]

    # Per-call work: flatten NCHW -> (B, 784), cast MXU operand to bf16.
    x2 = x_nchw.reshape(-1, IN_FEATURES).astype(jnp.bfloat16)
    B = x2.shape[0]

    args = [x2, prep["w1"], prep["w2"], prep["w3"], prep["w4"], prep["vec"]]

    in_specs = [
        pl.BlockSpec(x2.shape, lambda i: (0, 0)),            # x
        pl.BlockSpec(prep["w1"].shape, lambda i: (0, 0)),     # w1 (auto-DMA)
        pl.BlockSpec(memory_space=pl.ANY),                    # w2 (manual DMA)
        pl.BlockSpec(memory_space=pl.ANY),                    # w3 (manual DMA)
        pl.BlockSpec(memory_space=pl.ANY),                    # w4 (manual DMA)
        pl.BlockSpec(prep["vec"].shape, lambda i: (0, 0)),    # packed vectors
    ]
    out_spec = pl.BlockSpec((B, n_pad), lambda i: (0, 0))

    out_padded = pl.pallas_call(
        fc_kernel,
        grid=(1,),
        in_specs=in_specs,
        out_specs=out_spec,
        out_shape=jax.ShapeDtypeStruct((B, n_pad), jnp.float32),
        scratch_shapes=[
            pltpu.VMEM(prep["w2"].shape, jnp.bfloat16),
            pltpu.VMEM(prep["w3"].shape, jnp.bfloat16),
            pltpu.VMEM(prep["w4"].shape, jnp.bfloat16),
            pltpu.SemaphoreType.DMA((3,)),
        ],
        compiler_params=pltpu.CompilerParams(
            dimension_semantics=("arbitrary",)),
    )(*args)

    return out_padded[:, :out_features]


def fc_reference(x_nchw, params):
    """Pure-JAX reference using the SAME bf16-cast weights as the kernel."""
    x = x_nchw.reshape(-1, IN_FEATURES).astype(jnp.bfloat16)
    w = [params[f"w{i}"].astype(jnp.bfloat16) for i in range(1, 5)]
    h = x
    for i in range(3):
        z = jnp.dot(h, w[i], preferred_element_type=jnp.float32) + params[f"b{i+1}"]
        z = jnp.maximum(z, 0.0)
        mean = jnp.mean(z, axis=0, keepdims=True)
        var = jnp.mean((z - mean) ** 2, axis=0, keepdims=True)
        z = (z - mean) * jax.lax.rsqrt(var + EPS) * params[f"g{i+1}"] + params[f"be{i+1}"]
        h = z.astype(jnp.bfloat16)
    z = jnp.dot(h, w[3], preferred_element_type=jnp.float32) + params["b4"]
    return jax.nn.log_softmax(z, axis=-1)


def init_params(key, in_features=IN_FEATURES, num_units=256, out_features=10):
    # nn.Linear.reset_parameters-style init (uniform +-1/sqrt(fan_in));
    # BatchNorm affine: weight=1, bias=0 (PyTorch default).
    dims = [(in_features, num_units), (num_units, num_units),
            (num_units, num_units), (num_units, out_features)]
    params = {}
    for i, (fan_in, fan_out) in enumerate(dims, start=1):
        key, kw, kb = jax.random.split(key, 3)
        bound = 1.0 / (fan_in ** 0.5)
        params[f"w{i}"] = jax.random.uniform(
            kw, (fan_in, fan_out), jnp.float32, -bound, bound)
        params[f"b{i}"] = jax.random.uniform(
            kb, (1, fan_out), jnp.float32, -bound, bound)
        if i < 4:  # norm4 exists in __init__ but is unused in forward
            params[f"g{i}"] = jnp.ones((1, fan_out), jnp.float32)
            params[f"be{i}"] = jnp.zeros((1, fan_out), jnp.float32)
    return params


if __name__ == "__main__":
    key = jax.random.PRNGKey(0)
    key, kx = jax.random.split(key)

    B, C, H, W = 8, 1, 28, 28          # 28x28 fixed by view(-1, 28*28)
    num_units, out_features = 256, 10  # small num_units consistent with module API

    x = jax.random.normal(kx, (B, C, H, W), jnp.float32)
    params = init_params(key, in_features=H * W, num_units=num_units,
                         out_features=out_features)

    prep = prepare_params(params)               # one-time weight preprocessing
    prep = jax.tree_util.tree_map(jax.block_until_ready, prep)

    out = fc_forward(x, prep, out_features=out_features)
    out = jax.block_until_ready(out)

    assert out.shape == (B, out_features)
    assert bool(jnp.all(jnp.isfinite(out)))
    # log-softmax rows should exponentiate-sum to 1
    row_sums = jnp.sum(jnp.exp(out), axis=-1)
    assert bool(jnp.all(jnp.abs(row_sums - 1.0) < 1e-4))
    # match the pure-JAX reference (same bf16 weights) closely
    ref = fc_reference(x, params)
    assert bool(jnp.max(jnp.abs(out - ref)) < 1e-2)

    print("KERNEL_OK")
</pallas_src>

<mosaic_0001>
module attributes {stable_mosaic.version = 11 : i64} {
  func.func @fc_kernel(%arg0: i32, %arg1: memref<8x784xbf16, #tpu.memory_space<vmem>>, %arg2: memref<784x256xbf16, #tpu.memory_space<vmem>>, %arg3: memref<256x256xbf16, #tpu.memory_space<any>>, %arg4: memref<256x256xbf16, #tpu.memory_space<any>>, %arg5: memref<256x128xbf16, #tpu.memory_space<any>>, %arg6: memref<10x256xf32, #tpu.memory_space<vmem>>, %arg7: memref<8x128xf32, #tpu.memory_space<vmem>>, %arg8: memref<256x256xbf16, #tpu.memory_space<vmem>>, %arg9: memref<256x256xbf16, #tpu.memory_space<vmem>>, %arg10: memref<256x128xbf16, #tpu.memory_space<vmem>>, %arg11: memref<3x!tpu.dma_semaphore, #tpu.memory_space<semaphore_mem>>) attributes {dimension_semantics = [#tpu.dimension_semantics<arbitrary>], iteration_bounds = array<i64: 1>, scalar_prefetch = 0 : i64, scratch_operands = 4 : i64, tpu.core_type = #tpu.core_type<tc>, window_params = [{pipeline_mode = #tpu.pipeline_mode<synchronous>, transform_indices = @transform_0, window_bounds = array<i64: 8, 784>}, {pipeline_mode = #tpu.pipeline_mode<synchronous>, transform_indices = @transform_1, window_bounds = array<i64: 784, 256>}, {}, {}, {}, {pipeline_mode = #tpu.pipeline_mode<synchronous>, transform_indices = @transform_5, window_bounds = array<i64: 10, 256>}, {pipeline_mode = #tpu.pipeline_mode<synchronous>, transform_indices = @transform_6, window_bounds = array<i64: 8, 128>}]} {
    %c0_i32 = arith.constant 0 : i32
    %0 = tpu.memref_slice %arg11[%c0_i32] : memref<3x!tpu.dma_semaphore, #tpu.memory_space<semaphore_mem>> -> memref<1x!tpu.dma_semaphore, #tpu.memory_space<semaphore_mem>>
    %1 = tpu.memref_squeeze %0 : memref<1x!tpu.dma_semaphore, #tpu.memory_space<semaphore_mem>> -> memref<!tpu.dma_semaphore, #tpu.memory_space<semaphore_mem>>
    tpu.enqueue_dma source(%arg3 : memref<256x256xbf16, #tpu.memory_space<any>>) target(%arg8 : memref<256x256xbf16, #tpu.memory_space<vmem>>) target_semaphore(%1 : memref<!tpu.dma_semaphore, #tpu.memory_space<semaphore_mem>>)
    %c1_i32 = arith.constant 1 : i32
    %2 = tpu.memref_slice %arg11[%c1_i32] : memref<3x!tpu.dma_semaphore, #tpu.memory_space<semaphore_mem>> -> memref<1x!tpu.dma_semaphore, #tpu.memory_space<semaphore_mem>>
    %3 = tpu.memref_squeeze %2 : memref<1x!tpu.dma_semaphore, #tpu.memory_space<semaphore_mem>> -> memref<!tpu.dma_semaphore, #tpu.memory_space<semaphore_mem>>
    tpu.enqueue_dma source(%arg4 : memref<256x256xbf16, #tpu.memory_space<any>>) target(%arg9 : memref<256x256xbf16, #tpu.memory_space<vmem>>) target_semaphore(%3 : memref<!tpu.dma_semaphore, #tpu.memory_space<semaphore_mem>>)
    %c2_i32 = arith.constant 2 : i32
    %4 = tpu.memref_slice %arg11[%c2_i32] : memref<3x!tpu.dma_semaphore, #tpu.memory_space<semaphore_mem>> -> memref<1x!tpu.dma_semaphore, #tpu.memory_space<semaphore_mem>>
    %5 = tpu.memref_squeeze %4 : memref<1x!tpu.dma_semaphore, #tpu.memory_space<semaphore_mem>> -> memref<!tpu.dma_semaphore, #tpu.memory_space<semaphore_mem>>
    tpu.enqueue_dma source(%arg5 : memref<256x128xbf16, #tpu.memory_space<any>>) target(%arg10 : memref<256x128xbf16, #tpu.memory_space<vmem>>) target_semaphore(%5 : memref<!tpu.dma_semaphore, #tpu.memory_space<semaphore_mem>>)
    %c0 = arith.constant 0 : index
    %c0_0 = arith.constant 0 : index
    %6 = vector.load %arg6[%c0, %c0_0] : memref<10x256xf32, #tpu.memory_space<vmem>>, vector<10x256xf32>
    %7 = vector.extract_strided_slice %6 {offsets = [0, 0], sizes = [1, 256], strides = [1, 1]} : vector<10x256xf32> to vector<1x256xf32>
    %8 = vector.extract_strided_slice %6 {offsets = [1, 0], sizes = [1, 256], strides = [1, 1]} : vector<10x256xf32> to vector<1x256xf32>
    %9 = vector.extract_strided_slice %6 {offsets = [2, 0], sizes = [1, 256], strides = [1, 1]} : vector<10x256xf32> to vector<1x256xf32>
    %10 = vector.extract_strided_slice %6 {offsets = [3, 0], sizes = [1, 256], strides = [1, 1]} : vector<10x256xf32> to vector<1x256xf32>
    %11 = vector.extract_strided_slice %6 {offsets = [4, 0], sizes = [1, 256], strides = [1, 1]} : vector<10x256xf32> to vector<1x256xf32>
    %12 = vector.extract_strided_slice %6 {offsets = [5, 0], sizes = [1, 256], strides = [1, 1]} : vector<10x256xf32> to vector<1x256xf32>
    %13 = vector.extract_strided_slice %6 {offsets = [6, 0], sizes = [1, 256], strides = [1, 1]} : vector<10x256xf32> to vector<1x256xf32>
    %14 = vector.extract_strided_slice %6 {offsets = [7, 0], sizes = [1, 256], strides = [1, 1]} : vector<10x256xf32> to vector<1x256xf32>
    %15 = vector.extract_strided_slice %6 {offsets = [8, 0], sizes = [1, 256], strides = [1, 1]} : vector<10x256xf32> to vector<1x256xf32>
    %16 = vector.extract_strided_slice %6 {offsets = [9, 0], sizes = [1, 128], strides = [1, 1]} : vector<10x256xf32> to vector<1x128xf32>
    %c0_1 = arith.constant 0 : index
    %c0_2 = arith.constant 0 : index
    %17 = vector.load %arg1[%c0_1, %c0_2] : memref<8x784xbf16, #tpu.memory_space<vmem>>, vector<8x784xbf16>
    %c0_3 = arith.constant 0 : index
    %c0_4 = arith.constant 0 : index
    %18 = vector.load %arg2[%c0_3, %c0_4] : memref<784x256xbf16, #tpu.memory_space<vmem>>, vector<784x256xbf16>
    %cst = arith.constant dense<0.000000e+00> : vector<8x256xf32>
    %19 = tpu.matmul %17, %18, %cst {dimension_numbers = #tpu.dot_dimension_numbers<[1], [0], [0], [1], [0, 0, 1, 1], [], []>} : vector<8x784xbf16>, vector<784x256xbf16>, vector<8x256xf32> -> vector<8x256xf32>
    %20 = vector.broadcast %7 : vector<1x256xf32> to vector<8x256xf32>
    %21 = arith.addf %19, %20 : vector<8x256xf32>
    %cst_5 = arith.constant 0.000000e+00 : f32
    %22 = vector.broadcast %cst_5 : f32 to vector<8x256xf32>
    %23 = arith.maximumf %21, %22 : vector<8x256xf32>
    %cst_6 = arith.constant dense<0.000000e+00> : vector<256xf32>
    %24 = vector.multi_reduction <add>, %23, %cst_6 [0] : vector<8x256xf32> to vector<256xf32>
    %25 = vector.shape_cast %24 : vector<256xf32> to vector<1x256xf32>
    %cst_7 = arith.constant 8.000000e+00 : f32
    %26 = vector.broadcast %cst_7 : f32 to vector<1x256xf32>
    %27 = arith.divf %25, %26 : vector<1x256xf32>
    %28 = arith.mulf %23, %23 : vector<8x256xf32>
    %cst_8 = arith.constant dense<0.000000e+00> : vector<256xf32>
    %29 = vector.multi_reduction <add>, %28, %cst_8 [0] : vector<8x256xf32> to vector<256xf32>
    %30 = vector.shape_cast %29 : vector<256xf32> to vector<1x256xf32>
    %cst_9 = arith.constant 8.000000e+00 : f32
    %31 = vector.broadcast %cst_9 : f32 to vector<1x256xf32>
    %32 = arith.divf %30, %31 : vector<1x256xf32>
    %33 = arith.mulf %27, %27 : vector<1x256xf32>
    %34 = arith.subf %32, %33 : vector<1x256xf32>
    %cst_10 = arith.constant 9.99999974E-5 : f32
    %35 = vector.broadcast %cst_10 : f32 to vector<1x256xf32>
    %36 = arith.addf %34, %35 : vector<1x256xf32>
    %37 = math.rsqrt %36 : vector<1x256xf32>
    %38 = arith.mulf %8, %37 : vector<1x256xf32>
    %39 = arith.mulf %27, %38 : vector<1x256xf32>
    %40 = arith.subf %9, %39 : vector<1x256xf32>
    %41 = vector.broadcast %38 : vector<1x256xf32> to vector<8x256xf32>
    %42 = arith.mulf %23, %41 : vector<8x256xf32>
    %43 = vector.broadcast %40 : vector<1x256xf32> to vector<8x256xf32>
    %44 = arith.addf %42, %43 : vector<8x256xf32>
    %c0_i32_11 = arith.constant 0 : i32
    %45 = tpu.memref_slice %arg11[%c0_i32_11] : memref<3x!tpu.dma_semaphore, #tpu.memory_space<semaphore_mem>> -> memref<1x!tpu.dma_semaphore, #tpu.memory_space<semaphore_mem>>
    %46 = tpu.memref_squeeze %45 : memref<1x!tpu.dma_semaphore, #tpu.memory_space<semaphore_mem>> -> memref<!tpu.dma_semaphore, #tpu.memory_space<semaphore_mem>>
    tpu.wait_dma2 semaphore(%46 : memref<!tpu.dma_semaphore, #tpu.memory_space<semaphore_mem>>) src(%arg3 : memref<256x256xbf16, #tpu.memory_space<any>>) dst(%arg8 : memref<256x256xbf16, #tpu.memory_space<vmem>>)
    %47 = arith.truncf %44 : vector<8x256xf32> to vector<8x256xbf16>
    %c0_12 = arith.constant 0 : index
    %c0_13 = arith.constant 0 : index
    %48 = vector.load %arg8[%c0_12, %c0_13] : memref<256x256xbf16, #tpu.memory_space<vmem>>, vector<256x256xbf16>
    %cst_14 = arith.constant dense<0.000000e+00> : vector<8x256xf32>
    %49 = tpu.matmul %47, %48, %cst_14 {dimension_numbers = #tpu.dot_dimension_numbers<[1], [0], [0], [1], [0, 0, 1, 1], [], []>} : vector<8x256xbf16>, vector<256x256xbf16>, vector<8x256xf32> -> vector<8x256xf32>
    %50 = vector.broadcast %10 : vector<1x256xf32> to vector<8x256xf32>
    %51 = arith.addf %49, %50 : vector<8x256xf32>
    %cst_15 = arith.constant 0.000000e+00 : f32
    %52 = vector.broadcast %cst_15 : f32 to vector<8x256xf32>
    %53 = arith.maximumf %51, %52 : vector<8x256xf32>
    %cst_16 = arith.constant dense<0.000000e+00> : vector<256xf32>
    %54 = vector.multi_reduction <add>, %53, %cst_16 [0] : vector<8x256xf32> to vector<256xf32>
    %55 = vector.shape_cast %54 : vector<256xf32> to vector<1x256xf32>
    %cst_17 = arith.constant 8.000000e+00 : f32
    %56 = vector.broadcast %cst_17 : f32 to vector<1x256xf32>
    %57 = arith.divf %55, %56 : vector<1x256xf32>
    %58 = arith.mulf %53, %53 : vector<8x256xf32>
    %cst_18 = arith.constant dense<0.000000e+00> : vector<256xf32>
    %59 = vector.multi_reduction <add>, %58, %cst_18 [0] : vector<8x256xf32> to vector<256xf32>
    %60 = vector.shape_cast %59 : vector<256xf32> to vector<1x256xf32>
    %cst_19 = arith.constant 8.000000e+00 : f32
    %61 = vector.broadcast %cst_19 : f32 to vector<1x256xf32>
    %62 = arith.divf %60, %61 : vector<1x256xf32>
    %63 = arith.mulf %57, %57 : vector<1x256xf32>
    %64 = arith.subf %62, %63 : vector<1x256xf32>
    %cst_20 = arith.constant 9.99999974E-5 : f32
    %65 = vector.broadcast %cst_20 : f32 to vector<1x256xf32>
    %66 = arith.addf %64, %65 : vector<1x256xf32>
    %67 = math.rsqrt %66 : vector<1x256xf32>
    %68 = arith.mulf %11, %67 : vector<1x256xf32>
    %69 = arith.mulf %57, %68 : vector<1x256xf32>
    %70 = arith.subf %12, %69 : vector<1x256xf32>
    %71 = vector.broadcast %68 : vector<1x256xf32> to vector<8x256xf32>
    %72 = arith.mulf %53, %71 : vector<8x256xf32>
    %73 = vector.broadcast %70 : vector<1x256xf32> to vector<8x256xf32>
    %74 = arith.addf %72, %73 : vector<8x256xf32>
    %c1_i32_21 = arith.constant 1 : i32
    %75 = tpu.memref_slice %arg11[%c1_i32_21] : memref<3x!tpu.dma_semaphore, #tpu.memory_space<semaphore_mem>> -> memref<1x!tpu.dma_semaphore, #tpu.memory_space<semaphore_mem>>
    %76 = tpu.memref_squeeze %75 : memref<1x!tpu.dma_semaphore, #tpu.memory_space<semaphore_mem>> -> memref<!tpu.dma_semaphore, #tpu.memory_space<semaphore_mem>>
    tpu.wait_dma2 semaphore(%76 : memref<!tpu.dma_semaphore, #tpu.memory_space<semaphore_mem>>) src(%arg4 : memref<256x256xbf16, #tpu.memory_space<any>>) dst(%arg9 : memref<256x256xbf16, #tpu.memory_space<vmem>>)
    %77 = arith.truncf %74 : vector<8x256xf32> to vector<8x256xbf16>
    %c0_22 = arith.constant 0 : index
    %c0_23 = arith.constant 0 : index
    %78 = vector.load %arg9[%c0_22, %c0_23] : memref<256x256xbf16, #tpu.memory_space<vmem>>, vector<256x256xbf16>
    %cst_24 = arith.constant dense<0.000000e+00> : vector<8x256xf32>
    %79 = tpu.matmul %77, %78, %cst_24 {dimension_numbers = #tpu.dot_dimension_numbers<[1], [0], [0], [1], [0, 0, 1, 1], [], []>} : vector<8x256xbf16>, vector<256x256xbf16>, vector<8x256xf32> -> vector<8x256xf32>
    %80 = vector.broadcast %13 : vector<1x256xf32> to vector<8x256xf32>
    %81 = arith.addf %79, %80 : vector<8x256xf32>
    %cst_25 = arith.constant 0.000000e+00 : f32
    %82 = vector.broadcast %cst_25 : f32 to vector<8x256xf32>
    %83 = arith.maximumf %81, %82 : vector<8x256xf32>
    %cst_26 = arith.constant dense<0.000000e+00> : vector<256xf32>
    %84 = vector.multi_reduction <add>, %83, %cst_26 [0] : vector<8x256xf32> to vector<256xf32>
    %85 = vector.shape_cast %84 : vector<256xf32> to vector<1x256xf32>
    %cst_27 = arith.constant 8.000000e+00 : f32
    %86 = vector.broadcast %cst_27 : f32 to vector<1x256xf32>
    %87 = arith.divf %85, %86 : vector<1x256xf32>
    %88 = arith.mulf %83, %83 : vector<8x256xf32>
    %cst_28 = arith.constant dense<0.000000e+00> : vector<256xf32>
    %89 = vector.multi_reduction <add>, %88, %cst_28 [0] : vector<8x256xf32> to vector<256xf32>
    %90 = vector.shape_cast %89 : vector<256xf32> to vector<1x256xf32>
    %cst_29 = arith.constant 8.000000e+00 : f32
    %91 = vector.broadcast %cst_29 : f32 to vector<1x256xf32>
    %92 = arith.divf %90, %91 : vector<1x256xf32>
    %93 = arith.mulf %87, %87 : vector<1x256xf32>
    %94 = arith.subf %92, %93 : vector<1x256xf32>
    %cst_30 = arith.constant 9.99999974E-5 : f32
    %95 = vector.broadcast %cst_30 : f32 to vector<1x256xf32>
    %96 = arith.addf %94, %95 : vector<1x256xf32>
    %97 = math.rsqrt %96 : vector<1x256xf32>
    %98 = arith.mulf %14, %97 : vector<1x256xf32>
    %99 = arith.mulf %87, %98 : vector<1x256xf32>
    %100 = arith.subf %15, %99 : vector<1x256xf32>
    %101 = vector.broadcast %98 : vector<1x256xf32> to vector<8x256xf32>
    %102 = arith.mulf %83, %101 : vector<8x256xf32>
    %103 = vector.broadcast %100 : vector<1x256xf32> to vector<8x256xf32>
    %104 = arith.addf %102, %103 : vector<8x256xf32>
    %c2_i32_31 = arith.constant 2 : i32
    %105 = tpu.memref_slice %arg11[%c2_i32_31] : memref<3x!tpu.dma_semaphore, #tpu.memory_space<semaphore_mem>> -> memref<1x!tpu.dma_semaphore, #tpu.memory_space<semaphore_mem>>
    %106 = tpu.memref_squeeze %105 : memref<1x!tpu.dma_semaphore, #tpu.memory_space<semaphore_mem>> -> memref<!tpu.dma_semaphore, #tpu.memory_space<semaphore_mem>>
    tpu.wait_dma2 semaphore(%106 : memref<!tpu.dma_semaphore, #tpu.memory_space<semaphore_mem>>) src(%arg5 : memref<256x128xbf16, #tpu.memory_space<any>>) dst(%arg10 : memref<256x128xbf16, #tpu.memory_space<vmem>>)
    %107 = arith.truncf %104 : vector<8x256xf32> to vector<8x256xbf16>
    %c0_32 = arith.constant 0 : index
    %c0_33 = arith.constant 0 : index
    %108 = vector.load %arg10[%c0_32, %c0_33] : memref<256x128xbf16, #tpu.memory_space<vmem>>, vector<256x128xbf16>
    %cst_34 = arith.constant dense<0.000000e+00> : vector<8x128xf32>
    %109 = tpu.matmul %107, %108, %cst_34 {dimension_numbers = #tpu.dot_dimension_numbers<[1], [0], [0], [1], [0, 0, 1, 1], [], []>} : vector<8x256xbf16>, vector<256x128xbf16>, vector<8x128xf32> -> vector<8x128xf32>
    %110 = vector.broadcast %16 : vector<1x128xf32> to vector<8x128xf32>
    %111 = arith.addf %109, %110 : vector<8x128xf32>
    %cst_35 = arith.constant dense<0xFF800000> : vector<8xf32>
    %112 = vector.multi_reduction <maximumf>, %111, %cst_35 [1] : vector<8x128xf32> to vector<8xf32>
    %113 = vector.shape_cast %112 : vector<8xf32> to vector<8x1xf32>
    %114 = vector.broadcast %113 : vector<8x1xf32> to vector<8x128xf32>
    %115 = arith.subf %111, %114 : vector<8x128xf32>
    %116 = math.exp %115 : vector<8x128xf32>
    %cst_36 = arith.constant dense<0.000000e+00> : vector<8xf32>
    %117 = vector.multi_reduction <add>, %116, %cst_36 [1] : vector<8x128xf32> to vector<8xf32>
    %118 = vector.shape_cast %117 : vector<8xf32> to vector<8x1xf32>
    %119 = math.log %118 : vector<8x1xf32>
    %120 = arith.addf %119, %113 : vector<8x1xf32>
    %121 = vector.broadcast %120 : vector<8x1xf32> to vector<8x128xf32>
    %122 = arith.subf %111, %121 : vector<8x128xf32>
    %c0_37 = arith.constant 0 : index
    %c0_38 = arith.constant 0 : index
    %123 = vector.load %arg7[%c0_37, %c0_38] : memref<8x128xf32, #tpu.memory_space<vmem>>, vector<8x128xf32>
    tpu.vector_store %arg7[%c0_37, %c0_38], %122 {strides = array<i32>} : memref<8x128xf32, #tpu.memory_space<vmem>>, vector<8x128xf32>,
    return
  }
  func.func @transform_0(%arg0: i32) -> (i32, i32) {
    %c0_i32 = arith.constant 0 : i32
    %c0_i32_0 = arith.constant 0 : i32
    %c0_i32_1 = arith.constant 0 : i32
    return %c0_i32, %c0_i32_0 : i32, i32
  }
  func.func @transform_1(%arg0: i32) -> (i32, i32) {
    %c0_i32 = arith.constant 0 : i32
    %c0_i32_0 = arith.constant 0 : i32
    %c0_i32_1 = arith.constant 0 : i32
    return %c0_i32, %c0_i32_0 : i32, i32
  }
  func.func @transform_5(%arg0: i32) -> (i32, i32) {
    %c0_i32 = arith.constant 0 : i32
    %c0_i32_0 = arith.constant 0 : i32
    %c0_i32_1 = arith.constant 0 : i32
    return %c0_i32, %c0_i32_0 : i32, i32
  }
  func.func @transform_6(%arg0: i32) -> (i32, i32) {
    %c0_i32 = arith.constant 0 : i32
    %c0_i32_0 = arith.constant 0 : i32
    %c0_i32_1 = arith.constant 0 : i32
    return %c0_i32, %c0_i32_0 : i32, i32
  }
}

</mosaic_0001>

<llo_original>
// kernel: tpu_custom_call.1
$region0: #{tpu_custom_call.1}
  #allocation0 [shape = 'u32[]', space=smem, size = 0x4, offset = 0x4, fixed_abs, tag = 'smem constant byte address 0x4 - core index']
  #allocation1 [shape = 'u32[144,128]{1,0:T(1,128)}', space=vmem, size = 0x12000, scoped, tag = 'internal scratch']
  #allocation2 [shape = 'bf16[256,256]{1,0:T(8,128)(2,1)}', space=vmem, size = 0x20000, scoped, tag = 'scratch operand']
  #allocation3 [shape = 'bf16[256,256]{1,0:T(8,128)(2,1)}', space=vmem, size = 0x20000, scoped, tag = 'scratch operand']
  #allocation4 [shape = 'bf16[256,128]{1,0:T(8,128)(2,1)}', space=vmem, size = 0x10000, scoped, tag = 'scratch operand']
  #allocation5 [shape = 's32[3]{0}', space=sflag, size = 0xc, scoped, tag = 'scratch operand']
  #allocation13 [shape = 's32[]', space=sflag, size = 0x4, offset = 0, fixed_abs, tag = 'sflag constant byte address 0x0 - dummy sync flag']
  #allocation14 [shape = 's32[]', space=sflag, size = 0x4, offset = 0, fixed_abs, tag = 'sflag constant byte address 0x0 - dummy sync flag']
  #allocation15 [shape = 'u32[]', space=smem, size = 0x4, offset = 0x44, fixed_abs, tag = 'smem constant byte address 0x44 - assertion arg 0']
  #allocation16 [shape = 'u32[]', space=smem, size = 0x4, offset = 0x48, fixed_abs, tag = 'smem constant byte address 0x48 - assertion arg 1']
  #allocation17 [shape = 's32[]', space=sflag, size = 0x4, offset = 0, fixed_abs, tag = 'sflag constant byte address 0x0 - dummy sync flag']
  #allocation18 [shape = 's32[]', space=sflag, size = 0x4, offset = 0, fixed_abs, tag = 'sflag constant byte address 0x0 - dummy sync flag']
  #allocation19 [shape = 's32[]', space=sflag, size = 0x4, offset = 0, fixed_abs, tag = 'sflag constant byte address 0x0 - dummy sync flag']
  #allocation20 [shape = 's32[]', space=sflag, size = 0x4, offset = 0, fixed_abs, tag = 'sflag constant byte address 0x0 - dummy sync flag']
  %s0 = inlined_call_operand.hbm [shape: bf16[8,784], index: 0, kind: input, shape index: {}]
  %s1 = inlined_call_operand.hbm [shape: bf16[784,256], index: 1, kind: input, shape index: {}]
  %s2 = inlined_call_operand.hbm [shape: bf16[256,256], index: 2, kind: input, shape index: {}]
  %s3 = inlined_call_operand.hbm [shape: bf16[256,256], index: 3, kind: input, shape index: {}]
  %s4 = inlined_call_operand.hbm [shape: bf16[256,128], index: 4, kind: input, shape index: {}]
  %s5 = inlined_call_operand.hbm [shape: f32[10,256], index: 5, kind: input, shape index: {}]
  %s6 = inlined_call_operand.hbm [shape: f32[8,128], index: 6, kind: output, shape index: {}]
  %s7 = sld [smem:[#allocation0]]
  $region46: #{tpu_custom_call.1} parent=0
    _
  %s9 = ssub.s32 1, %s7
  %s10 = scalar_select 0, %s9, %s7
  $region1: #{tpu_custom_call.1} parent=0
    #allocation6 [shape = 'u8[14336]{0}', space=vmem, size = 0x3800, scoped, tag = 'input window, operand 0, single buffered']
    #allocation7 [shape = 's32[1]{0}', space=sflag, size = 0x4, scoped, tag = 'scoped memory for tpu_custom_call.1']
    #allocation8 [shape = 's32[1]{0}', space=sflag, size = 0x4, scoped, tag = 'scoped memory for tpu_custom_call.1']
    #allocation9 [shape = 'u8[401408]{0}', space=vmem, size = 0x62000, scoped, tag = 'input window, operand 1, single buffered']
    #allocation10 [shape = 's32[1]{0}', space=sflag, size = 0x4, scoped, tag = 'scoped memory for tpu_custom_call.1']
    #allocation11 [shape = 'u8[16384]{0}', space=vmem, size = 0x4000, scoped, tag = 'input window, operand 5, single buffered']
    #allocation12 [shape = 'u8[4096]{0}', space=vmem, size = 0x1000, scoped, tag = 'output window, operand 0, single buffered']
    %11 = vsyncpa [#allocation7], 0
    %12 = vsyncpa [#allocation10], 0
    %13 = vsyncpa [#allocation8], 0
    // Predicated region
    $region2: #{tpu_custom_call.1} parent=1 // pred_check
      _
    $region3: #{tpu_custom_call.1} parent=1 // pred_check_branch
      %15 = sbr.rel (0) target = $region5
    $region4: #{tpu_custom_call.1} parent=1 // pred_region
      %s17 = ssub.s32 448, 448
      %18 = vsyncadd [#allocation7], %s17
      %s20 = sshll.u32 [#allocation6], 4
      %s21 = int_to_ptr.vmem [resolvable:$true] %s20
      %23 = dma.hbm_to_vmem [thread:$0]  %s0, 448, %s21, [#allocation7]
    $region5: #{tpu_custom_call.1} parent=1 // pred_fallthru
      _
    // Predicated region
    $region6: #{tpu_custom_call.1} parent=1 // pred_check
      _
    $region7: #{tpu_custom_call.1} parent=1 // pred_check_branch
      %25 = sbr.rel (0) target = $region9
    $region8: #{tpu_custom_call.1} parent=1 // pred_region
      %s27 = ssub.s32 12544, 12544
      %28 = vsyncadd [#allocation10], %s27
      %s29 = sshll.u32 [#allocation9], 4
      %s30 = int_to_ptr.vmem [resolvable:$true] %s29
      %35 = dma.hbm_to_vmem [thread:$0]  %s1, 12544, %s30, [#allocation10], 128, 128, 8
    $region9: #{tpu_custom_call.1} parent=1 // pred_fallthru
      _
    // Predicated region
    $region10: #{tpu_custom_call.1} parent=1 // pred_check
      _
    $region11: #{tpu_custom_call.1} parent=1 // pred_check_branch
      %37 = sbr.rel (0) target = $region13
    $region12: #{tpu_custom_call.1} parent=1 // pred_region
      %s39 = ssub.s32 512, 512
      %40 = vsyncadd [#allocation10], %s39
      %s41 = sshll.u32 [#allocation11], 4
      %s42 = int_to_ptr.vmem [resolvable:$true] %s41
      %47 = dma.hbm_to_vmem [thread:$0]  %s5, 512, %s42, [#allocation10], 256, 256, 16
    $region13: #{tpu_custom_call.1} parent=1 // pred_fallthru
      _
    // Predicated region
    $region14: #{tpu_custom_call.1} parent=1 // pred_check
      _
    $region15: #{tpu_custom_call.1} parent=1 // pred_check_branch
      %49 = sbr.rel (0) target = $region17
    $region16: #{tpu_custom_call.1} parent=1 // pred_region
      %50 = dma.done [#allocation7], 448
    $region17: #{tpu_custom_call.1} parent=1 // pred_fallthru
      _
    // Predicated region
    $region18: #{tpu_custom_call.1} parent=1 // pred_check
      _
    $region19: #{tpu_custom_call.1} parent=1 // pred_check_branch
      %52 = sbr.rel (0) target = $region21
    $region20: #{tpu_custom_call.1} parent=1 // pred_region
      %53 = dma.done [#allocation10], 12544
    $region21: #{tpu_custom_call.1} parent=1 // pred_fallthru
      _
    // Predicated region
    $region22: #{tpu_custom_call.1} parent=1 // pred_check
      _
    $region23: #{tpu_custom_call.1} parent=1 // pred_check_branch
      %55 = sbr.rel (0) target = $region25
    $region24: #{tpu_custom_call.1} parent=1 // pred_region
      %56 = dma.done [#allocation10], 512
    $region25: #{tpu_custom_call.1} parent=1 // pred_fallthru
      _
    // Predicated region
    $region26: #{tpu_custom_call.1} parent=1 // pred_check
      _
    $region27: #{tpu_custom_call.1} parent=1 // pred_check_branch
      %59 = sbr.rel target = $region29
    $region28: #{tpu_custom_call.1} parent=1 // pred_region
      %60 = sst [smem:[#allocation15]] [#allocation14]
      %61 = sst [smem:[#allocation16]] [#allocation13]
    $region29: #{tpu_custom_call.1} parent=1 // pred_fallthru
      _
    %63 = shalt.err (0)
    %s65 = sshll.u32 [#allocation2], 4
    %s66 = int_to_ptr.vmem [resolvable:$true] %s65
    %68 = dma.hbm_to_vmem [thread:$0]  %s2, 4096, %s66, [#allocation5]
    %s69 = scalar_lea.sflag [#allocation5], 1
    // Predicated region
    $region30: #{tpu_custom_call.1} parent=1 // pred_check
      _
    $region31: #{tpu_custom_call.1} parent=1 // pred_check_branch
      %71 = sbr.rel target = $region33
    $region32: #{tpu_custom_call.1} parent=1 // pred_region
      %72 = sst [smem:[#allocation15]] [#allocation18]
      %73 = sst [smem:[#allocation16]] [#allocation17]
    $region33: #{tpu_custom_call.1} parent=1 // pred_fallthru
      _
    %75 = shalt.err (0)
    %s77 = sshll.u32 [#allocation3], 4
    %s78 = int_to_ptr.vmem [resolvable:$true] %s77
    %80 = dma.hbm_to_vmem [thread:$0]  %s3, 4096, %s78, %s69
    %s81 = scalar_lea.sflag [#allocation5], 2
    // Predicated region
    $region34: #{tpu_custom_call.1} parent=1 // pred_check
      _
    $region35: #{tpu_custom_call.1} parent=1 // pred_check_branch
      %83 = sbr.rel target = $region37
    $region36: #{tpu_custom_call.1} parent=1 // pred_region
      %84 = sst [smem:[#allocation15]] [#allocation20]
      %85 = sst [smem:[#allocation16]] [#allocation19]
    $region37: #{tpu_custom_call.1} parent=1 // pred_fallthru
      _
    %87 = shalt.err (0)
    %s89 = sshll.u32 [#allocation4], 4
    %s90 = int_to_ptr.vmem [resolvable:$true] %s89
    %92 = dma.hbm_to_vmem [thread:$0]  %s4, 2048, %s90, %s81
    %v93 = vld [vmem:[#allocation11] sm:$0xff]
    %v94 = vld [vmem:[#allocation11 + $0x8] sm:$0xff]
    %v95 = vld [vmem:[#allocation11 + $0x10] sm:$0x3]
    %v96 = vld [vmem:[#allocation11 + $0x18] sm:$0x3]
    %v97 = vld [vmem:[#allocation6] sm:$0xff]
    %v98 = vld [vmem:[#allocation6 + $0x8] sm:$0xff]
    %v99 = vld [vmem:[#allocation6 + $0x10] sm:$0xff]
    %v100 = vld [vmem:[#allocation6 + $0x18] sm:$0xf]
    %v101 = vld [vmem:[#allocation9] sm:$0xff]
    %v102 = vld [vmem:[#allocation9 + $0x8] sm:$0xff]
    %v103 = vld [vmem:[#allocation9 + $0x10] sm:$0xff]
    %v104 = vld [vmem:[#allocation9 + $0x18] sm:$0xff]
    %v105 = vld [vmem:[#allocation9 + $0x20] sm:$0xff]
    %v106 = vld [vmem:[#allocation9 + $0x28] sm:$0xff]
    %v107 = vld [vmem:[#allocation9 + $0x30] sm:$0xff]
    %v108 = vld [vmem:[#allocation9 + $0x38] sm:$0xff]
    %v109 = vld [vmem:[#allocation9 + $0x40] sm:$0xff]
    %v110 = vld [vmem:[#allocation9 + $0x48] sm:$0xff]
    %v111 = vld [vmem:[#allocation9 + $0x50] sm:$0xff]
    %v112 = vld [vmem:[#allocation9 + $0x58] sm:$0xff]
    %v113 = vld [vmem:[#allocation9 + $0x60] sm:$0xff]
    %v114 = vld [vmem:[#allocation9 + $0x68] sm:$0xff]
    %v115 = vld [vmem:[#allocation9 + $0x70] sm:$0xff]
    %v116 = vld [vmem:[#allocation9 + $0x78] sm:$0xff]
    %v117 = vld [vmem:[#allocation9 + $0x80] sm:$0xff]
    %v118 = vld [vmem:[#allocation9 + $0x88] sm:$0xff]
    %v119 = vld [vmem:[#allocation9 + $0x90] sm:$0xff]
    %v120 = vld [vmem:[#allocation9 + $0x98] sm:$0xff]
    %v121 = vld [vmem:[#allocation9 + $0xa0] sm:$0xff]
    %v122 = vld [vmem:[#allocation9 + $0xa8] sm:$0xff]
    %v123 = vld [vmem:[#allocation9 + $0xb0] sm:$0xff]
    %v124 = vld [vmem:[#allocation9 + $0xb8] sm:$0xff]
    %v125 = vld [vmem:[#allocation9 + $0xc0] sm:$0xff]
    %v126 = vld [vmem:[#allocation9 + $0xc8] sm:$0xff]
    %v127 = vld [vmem:[#allocation9 + $0xd0] sm:$0xff]
    %v128 = vld [vmem:[#allocation9 + $0xd8] sm:$0xff]
    %v129 = vld [vmem:[#allocation9 + $0xe0] sm:$0xff]
    %v130 = vld [vmem:[#allocation9 + $0xe8] sm:$0xff]
    %v131 = vld [vmem:[#allocation9 + $0xf0] sm:$0xff]
    %v132 = vld [vmem:[#allocation9 + $0xf8] sm:$0xff]
    %v133 = vld [vmem:[#allocation9 + $0x100] sm:$0xff]
    %v134 = vld [vmem:[#allocation9 + $0x108] sm:$0xff]
    %v135 = vld [vmem:[#allocation9 + $0x110] sm:$0xff]
    %v136 = vld [vmem:[#allocation9 + $0x118] sm:$0xff]
    %v137 = vld [vmem:[#allocation9 + $0x120] sm:$0xff]
    %v138 = vld [vmem:[#allocation9 + $0x128] sm:$0xff]
    %v139 = vld [vmem:[#allocation9 + $0x130] sm:$0xff]
    %v140 = vld [vmem:[#allocation9 + $0x138] sm:$0xff]
    %v141 = vld [vmem:[#allocation9 + $0x140] sm:$0xff]
    %v142 = vld [vmem:[#allocation9 + $0x148] sm:$0xff]
    %v143 = vld [vmem:[#allocation9 + $0x150] sm:$0xff]
    %v144 = vld [vmem:[#allocation9 + $0x158] sm:$0xff]
    %v145 = vld [vmem:[#allocation9 + $0x160] sm:$0xff]
    %v146 = vld [vmem:[#allocation9 + $0x168] sm:$0xff]
    %v147 = vld [vmem:[#allocation9 + $0x170] sm:$0xff]
    %v148 = vld [vmem:[#allocation9 + $0x178] sm:$0xff]
    %v149 = vld [vmem:[#allocation9 + $0x180] sm:$0xff]
    %v150 = vld [vmem:[#allocation9 + $0x188] sm:$0xff]
    %v151 = vld [vmem:[#allocation9 + $0x190] sm:$0xff]
    %v152 = vld [vmem:[#allocation9 + $0x198] sm:$0xff]
    %v153 = vld [vmem:[#allocation9 + $0x1a0] sm:$0xff]
    %v154 = vld [vmem:[#allocation9 + $0x1a8] sm:$0xff]
    %v155 = vld [vmem:[#allocation9 + $0x1b0] sm:$0xff]
    %v156 = vld [vmem:[#allocation9 + $0x1b8] sm:$0xff]
    %v157 = vld [vmem:[#allocation9 + $0x1c0] sm:$0xff]
    %v158 = vld [vmem:[#allocation9 + $0x1c8] sm:$0xff]
    %v159 = vld [vmem:[#allocation9 + $0x1d0] sm:$0xff]
    %v160 = vld [vmem:[#allocation9 + $0x1d8] sm:$0xff]
    %v161 = vld [vmem:[#allocation9 + $0x1e0] sm:$0xff]
    %v162 = vld [vmem:[#allocation9 + $0x1e8] sm:$0xff]
    %v163 = vld [vmem:[#allocation9 + $0x1f0] sm:$0xff]
    %v164 = vld [vmem:[#allocation9 + $0x1f8] sm:$0xff]
    %v165 = vld [vmem:[#allocation9 + $0x200] sm:$0xff]
    %v166 = vld [vmem:[#allocation9 + $0x208] sm:$0xff]
    %v167 = vld [vmem:[#allocation9 + $0x210] sm:$0xff]
    %v168 = vld [vmem:[#allocation9 + $0x218] sm:$0xff]
    %v169 = vld [vmem:[#allocation9 + $0x220] sm:$0xff]
    %v170 = vld [vmem:[#allocation9 + $0x228] sm:$0xff]
    %v171 = vld [vmem:[#allocation9 + $0x230] sm:$0xff]
    %v172 = vld [vmem:[#allocation9 + $0x238] sm:$0xff]
    %v173 = vld [vmem:[#allocation9 + $0x240] sm:$0xff]
    %v174 = vld [vmem:[#allocation9 + $0x248] sm:$0xff]
    %v175 = vld [vmem:[#allocation9 + $0x250] sm:$0xff]
    %v176 = vld [vmem:[#allocation9 + $0x258] sm:$0xff]
    %v177 = vld [vmem:[#allocation9 + $0x260] sm:$0xff]
    %v178 = vld [vmem:[#allocation9 + $0x268] sm:$0xff]
    %v179 = vld [vmem:[#allocation9 + $0x270] sm:$0xff]
    %v180 = vld [vmem:[#allocation9 + $0x278] sm:$0xff]
    %v181 = vld [vmem:[#allocation9 + $0x280] sm:$0xff]
    %v182 = vld [vmem:[#allocation9 + $0x288] sm:$0xff]
    %v183 = vld [vmem:[#allocation9 + $0x290] sm:$0xff]
    %v184 = vld [vmem:[#allocation9 + $0x298] sm:$0xff]
    %v185 = vld [vmem:[#allocation9 + $0x2a0] sm:$0xff]
    %v186 = vld [vmem:[#allocation9 + $0x2a8] sm:$0xff]
    %v187 = vld [vmem:[#allocation9 + $0x2b0] sm:$0xff]
    %v188 = vld [vmem:[#allocation9 + $0x2b8] sm:$0xff]
    %v189 = vld [vmem:[#allocation9 + $0x2c0] sm:$0xff]
    %v190 = vld [vmem:[#allocation9 + $0x2c8] sm:$0xff]
    %v191 = vld [vmem:[#allocation9 + $0x2d0] sm:$0xff]
    %v192 = vld [vmem:[#allocation9 + $0x2d8] sm:$0xff]
    %v193 = vld [vmem:[#allocation9 + $0x2e0] sm:$0xff]
    %v194 = vld [vmem:[#allocation9 + $0x2e8] sm:$0xff]
    %v195 = vld [vmem:[#allocation9 + $0x2f0] sm:$0xff]
    %v196 = vld [vmem:[#allocation9 + $0x2f8] sm:$0xff]
    %v197 = vld [vmem:[#allocation9 + $0x300] sm:$0xff]
    %v198 = vld [vmem:[#allocation9 + $0x308] sm:$0xff]
    %v199 = vlaneseq
    %v200 = vshrl.u32 %v199, 7
    %v201 = vsub.s32 0, %v200
    %v202 = vrot.slane %v93, %v201
    %v203 = vlaneseq
    %v204 = vshrl.u32 %v203, 7
    %v205 = vsub.s32 0, %v204
    %v206 = vrot.slane %v94, %v205
    %v211 = vunpack.c.l.b16 %v97
    %v212 = vunpack.c.h.b16 %v97
    %v213 = vunpack.c.l.b16 %v98
    %v214 = vunpack.c.h.b16 %v98
    %v215 = vunpack.c.l.b16 %v99
    %v216 = vunpack.c.h.b16 %v99
    %v217 = vunpack.c.l.b16 %v100
    %v218 = vpack.c.b16 %v211, %v211
    %v219 = vpack.c.b16 %v212, %v212
    %v220 = vpack.c.b16 %v213, %v213
    %v221 = vpack.c.b16 %v214, %v214
    %v222 = vpack.c.b16 %v215, %v215
    %v223 = vpack.c.b16 %v216, %v216
    %v224 = vpack.c.b16 %v217, %v217
    %v329 = vunpack.c.l.b16 %v101
    %v330 = vunpack.c.h.b16 %v101
    %v331 = vunpack.c.l.b16 %v102
    %v332 = vunpack.c.h.b16 %v102
    %v333 = vunpack.c.l.b16 %v103
    %v334 = vunpack.c.h.b16 %v103
    %v335 = vunpack.c.l.b16 %v104
    %v336 = vunpack.c.h.b16 %v104
    %v337 = vunpack.c.l.b16 %v105
    %v338 = vunpack.c.h.b16 %v105
    %v339 = vunpack.c.l.b16 %v106
    %v340 = vunpack.c.h.b16 %v106
    %v341 = vunpack.c.l.b16 %v107
    %v342 = vunpack.c.h.b16 %v107
    %v343 = vunpack.c.l.b16 %v108
    %v344 = vunpack.c.h.b16 %v108
    %v345 = vunpack.c.l.b16 %v109
    %v346 = vunpack.c.h.b16 %v109
    %v347 = vunpack.c.l.b16 %v110
    %v348 = vunpack.c.h.b16 %v110
    %v349 = vunpack.c.l.b16 %v111
    %v350 = vunpack.c.h.b16 %v111
    %v351 = vunpack.c.l.b16 %v112
    %v352 = vunpack.c.h.b16 %v112
    %v353 = vunpack.c.l.b16 %v113
    %v354 = vunpack.c.h.b16 %v113
    %v355 = vunpack.c.l.b16 %v114
    %v356 = vunpack.c.h.b16 %v114
    %v357 = vunpack.c.l.b16 %v115
    %v358 = vunpack.c.h.b16 %v115
    %v359 = vunpack.c.l.b16 %v116
    %v360 = vunpack.c.h.b16 %v116
    %v361 = vunpack.c.l.b16 %v117
    %v362 = vunpack.c.h.b16 %v117
    %v363 = vunpack.c.l.b16 %v118
    %v364 = vunpack.c.h.b16 %v118
    %v365 = vunpack.c.l.b16 %v119
    %v366 = vunpack.c.h.b16 %v119
    %v367 = vunpack.c.l.b16 %v120
    %v368 = vunpack.c.h.b16 %v120
    %v369 = vunpack.c.l.b16 %v121
    %v370 = vunpack.c.h.b16 %v121
    %v371 = vunpack.c.l.b16 %v122
    %v372 = vunpack.c.h.b16 %v122
    %v373 = vunpack.c.l.b16 %v123
    %v374 = vunpack.c.h.b16 %v123
    %v375 = vunpack.c.l.b16 %v124
    %v376 = vunpack.c.h.b16 %v124
    %v377 = vunpack.c.l.b16 %v125
    %v378 = vunpack.c.h.b16 %v125
    %v379 = vunpack.c.l.b16 %v126
    %v380 = vunpack.c.h.b16 %v126
    %v381 = vunpack.c.l.b16 %v127
    %v382 = vunpack.c.h.b16 %v127
    %v383 = vunpack.c.l.b16 %v128
    %v384 = vunpack.c.h.b16 %v128
    %v385 = vunpack.c.l.b16 %v129
    %v386 = vunpack.c.h.b16 %v129
    %v387 = vunpack.c.l.b16 %v130
    %v388 = vunpack.c.h.b16 %v130
    %v389 = vunpack.c.l.b16 %v131
    %v390 = vunpack.c.h.b16 %v131
    %v391 = vunpack.c.l.b16 %v132
    %v392 = vunpack.c.h.b16 %v132
    %v393 = vunpack.c.l.b16 %v133
    %v394 = vunpack.c.h.b16 %v133
    %v395 = vunpack.c.l.b16 %v134
    %v396 = vunpack.c.h.b16 %v134
    %v397 = vunpack.c.l.b16 %v135
    %v398 = vunpack.c.h.b16 %v135
    %v399 = vunpack.c.l.b16 %v136
    %v400 = vunpack.c.h.b16 %v136
    %v401 = vunpack.c.l.b16 %v137
    %v402 = vunpack.c.h.b16 %v137
    %v403 = vunpack.c.l.b16 %v138
    %v404 = vunpack.c.h.b16 %v138
    %v405 = vunpack.c.l.b16 %v139
    %v406 = vunpack.c.h.b16 %v139
    %v407 = vunpack.c.l.b16 %v140
    %v408 = vunpack.c.h.b16 %v140
    %v409 = vunpack.c.l.b16 %v141
    %v410 = vunpack.c.h.b16 %v141
    %v411 = vunpack.c.l.b16 %v142
    %v412 = vunpack.c.h.b16 %v142
    %v413 = vunpack.c.l.b16 %v143
    %v414 = vunpack.c.h.b16 %v143
    %v415 = vunpack.c.l.b16 %v144
    %v416 = vunpack.c.h.b16 %v144
    %v417 = vunpack.c.l.b16 %v145
    %v418 = vunpack.c.h.b16 %v145
    %v419 = vunpack.c.l.b16 %v146
    %v420 = vunpack.c.h.b16 %v146
    %v421 = vunpack.c.l.b16 %v147
    %v422 = vunpack.c.h.b16 %v147
    %v423 = vunpack.c.l.b16 %v148
    %v424 = vunpack.c.h.b16 %v148
    %v425 = vunpack.c.l.b16 %v149
    %v426 = vunpack.c.h.b16 %v149
    %v427 = vunpack.c.l.b16 %v150
    %v428 = vunpack.c.h.b16 %v150
    %v429 = vunpack.c.l.b16 %v151
    %v430 = vunpack.c.h.b16 %v151
    %v431 = vunpack.c.l.b16 %v152
    %v432 = vunpack.c.h.b16 %v152
    %v433 = vunpack.c.l.b16 %v153
    %v434 = vunpack.c.h.b16 %v153
    %v435 = vunpack.c.l.b16 %v154
    %v436 = vunpack.c.h.b16 %v154
    %v437 = vunpack.c.l.b16 %v155
    %v438 = vunpack.c.h.b16 %v155
    %v439 = vunpack.c.l.b16 %v156
    %v440 = vunpack.c.h.b16 %v156
    %v441 = vunpack.c.l.b16 %v157
    %v442 = vunpack.c.h.b16 %v157
    %v443 = vunpack.c.l.b16 %v158
    %v444 = vunpack.c.h.b16 %v158
    %v445 = vunpack.c.l.b16 %v159
    %v446 = vunpack.c.h.b16 %v159
    %v447 = vunpack.c.l.b16 %v160
    %v448 = vunpack.c.h.b16 %v160
    %v449 = vunpack.c.l.b16 %v161
    %v450 = vunpack.c.h.b16 %v161
    %v451 = vunpack.c.l.b16 %v162
    %v452 = vunpack.c.h.b16 %v162
    %v453 = vunpack.c.l.b16 %v163
    %v454 = vunpack.c.h.b16 %v163
    %v455 = vunpack.c.l.b16 %v164
    %v456 = vunpack.c.h.b16 %v164
    %v457 = vunpack.c.l.b16 %v165
    %v458 = vunpack.c.h.b16 %v165
    %v459 = vunpack.c.l.b16 %v166
    %v460 = vunpack.c.h.b16 %v166
    %v461 = vunpack.c.l.b16 %v167
    %v462 = vunpack.c.h.b16 %v167
    %v463 = vunpack.c.l.b16 %v168
    %v464 = vunpack.c.h.b16 %v168
    %v465 = vunpack.c.l.b16 %v169
    %v466 = vunpack.c.h.b16 %v169
    %v467 = vunpack.c.l.b16 %v170
    %v468 = vunpack.c.h.b16 %v170
    %v469 = vunpack.c.l.b16 %v171
    %v470 = vunpack.c.h.b16 %v171
    %v471 = vunpack.c.l.b16 %v172
    %v472 = vunpack.c.h.b16 %v172
    %v473 = vunpack.c.l.b16 %v173
    %v474 = vunpack.c.h.b16 %v173
    %v475 = vunpack.c.l.b16 %v174
    %v476 = vunpack.c.h.b16 %v174
    %v477 = vunpack.c.l.b16 %v175
    %v478 = vunpack.c.h.b16 %v175
    %v479 = vunpack.c.l.b16 %v176
    %v480 = vunpack.c.h.b16 %v176
    %v481 = vunpack.c.l.b16 %v177
    %v482 = vunpack.c.h.b16 %v177
    %v483 = vunpack.c.l.b16 %v178
    %v484 = vunpack.c.h.b16 %v178
    %v485 = vunpack.c.l.b16 %v179
    %v486 = vunpack.c.h.b16 %v179
    %v487 = vunpack.c.l.b16 %v180
    %v488 = vunpack.c.h.b16 %v180
    %v489 = vunpack.c.l.b16 %v181
    %v490 = vunpack.c.h.b16 %v181
    %v491 = vunpack.c.l.b16 %v182
    %v492 = vunpack.c.h.b16 %v182
    %v493 = vunpack.c.l.b16 %v183
    %v494 = vunpack.c.h.b16 %v183
    %v495 = vunpack.c.l.b16 %v184
    %v496 = vunpack.c.h.b16 %v184
    %v497 = vunpack.c.l.b16 %v185
    %v498 = vunpack.c.h.b16 %v185
    %v499 = vunpack.c.l.b16 %v186
    %v500 = vunpack.c.h.b16 %v186
    %v501 = vunpack.c.l.b16 %v187
    %v502 = vunpack.c.h.b16 %v187
    %v503 = vunpack.c.l.b16 %v188
    %v504 = vunpack.c.h.b16 %v188
    %v505 = vunpack.c.l.b16 %v189
    %v506 = vunpack.c.h.b16 %v189
    %v507 = vunpack.c.l.b16 %v190
    %v508 = vunpack.c.h.b16 %v190
    %v509 = vunpack.c.l.b16 %v191
    %v510 = vunpack.c.h.b16 %v191
    %v511 = vunpack.c.l.b16 %v192
    %v512 = vunpack.c.h.b16 %v192
    %v513 = vunpack.c.l.b16 %v193
    %v514 = vunpack.c.h.b16 %v193
    %v515 = vunpack.c.l.b16 %v194
    %v516 = vunpack.c.h.b16 %v194
    %v517 = vunpack.c.l.b16 %v195
    %v518 = vunpack.c.h.b16 %v195
    %v519 = vunpack.c.l.b16 %v196
    %v520 = vunpack.c.h.b16 %v196
    %v521 = vunpack.c.l.b16 %v197
    %v522 = vunpack.c.h.b16 %v197
    %v523 = vunpack.c.l.b16 %v198
    %v524 = vunpack.c.h.b16 %v198
    %v525 = vpack.c.b16 %v331, %v329
    %v526 = vpack.c.b16 %v332, %v330
    %v527 = vpack.c.b16 %v335, %v333
    %v528 = vpack.c.b16 %v336, %v334
    %v529 = vpack.c.b16 %v339, %v337
    %v530 = vpack.c.b16 %v340, %v338
    %v531 = vpack.c.b16 %v343, %v341
    %v532 = vpack.c.b16 %v344, %v342
    %v533 = vpack.c.b16 %v347, %v345
    %v534 = vpack.c.b16 %v348, %v346
    %v535 = vpack.c.b16 %v351, %v349
    %v536 = vpack.c.b16 %v352, %v350
    %v537 = vpack.c.b16 %v355, %v353
    %v538 = vpack.c.b16 %v356, %v354
    %v539 = vpack.c.b16 %v359, %v357
    %v540 = vpack.c.b16 %v360, %v358
    %v541 = vpack.c.b16 %v363, %v361
    %v542 = vpack.c.b16 %v364, %v362
    %v543 = vpack.c.b16 %v367, %v365
    %v544 = vpack.c.b16 %v368, %v366
    %v545 = vpack.c.b16 %v371, %v369
    %v546 = vpack.c.b16 %v372, %v370
    %v547 = vpack.c.b16 %v375, %v373
    %v548 = vpack.c.b16 %v376, %v374
    %v549 = vpack.c.b16 %v379, %v377
    %v550 = vpack.c.b16 %v380, %v378
    %v551 = vpack.c.b16 %v383, %v381
    %v552 = vpack.c.b16 %v384, %v382
    %v553 = vpack.c.b16 %v387, %v385
    %v554 = vpack.c.b16 %v388, %v386
    %v555 = vpack.c.b16 %v391, %v389
    %v556 = vpack.c.b16 %v392, %v390
    %v557 = vpack.c.b16 %v395, %v393
    %v558 = vpack.c.b16 %v396, %v394
    %v559 = vpack.c.b16 %v399, %v397
    %v560 = vpack.c.b16 %v400, %v398
    %v561 = vpack.c.b16 %v403, %v401
    %v562 = vpack.c.b16 %v404, %v402
    %v563 = vpack.c.b16 %v407, %v405
    %v564 = vpack.c.b16 %v408, %v406
    %v565 = vpack.c.b16 %v411, %v409
    %v566 = vpack.c.b16 %v412, %v410
    %v567 = vpack.c.b16 %v415, %v413
    %v568 = vpack.c.b16 %v416, %v414
    %v569 = vpack.c.b16 %v419, %v417
    %v570 = vpack.c.b16 %v420, %v418
    %v571 = vpack.c.b16 %v423, %v421
    %v572 = vpack.c.b16 %v424, %v422
    %v573 = vpack.c.b16 %v427, %v425
    %v574 = vpack.c.b16 %v428, %v426
    %v575 = vpack.c.b16 %v431, %v429
    %v576 = vpack.c.b16 %v432, %v430
    %v577 = vpack.c.b16 %v435, %v433
    %v578 = vpack.c.b16 %v436, %v434
    %v579 = vpack.c.b16 %v439, %v437
    %v580 = vpack.c.b16 %v440, %v438
    %v581 = vpack.c.b16 %v443, %v441
    %v582 = vpack.c.b16 %v444, %v442
    %v583 = vpack.c.b16 %v447, %v445
    %v584 = vpack.c.b16 %v448, %v446
    %v585 = vpack.c.b16 %v451, %v449
    %v586 = vpack.c.b16 %v452, %v450
    %v587 = vpack.c.b16 %v455, %v453
    %v588 = vpack.c.b16 %v456, %v454
    %v589 = vpack.c.b16 %v459, %v457
    %v590 = vpack.c.b16 %v460, %v458
    %v591 = vpack.c.b16 %v463, %v461
    %v592 = vpack.c.b16 %v464, %v462
    %v593 = vpack.c.b16 %v467, %v465
    %v594 = vpack.c.b16 %v468, %v466
    %v595 = vpack.c.b16 %v471, %v469
    %v596 = vpack.c.b16 %v472, %v470
    %v597 = vpack.c.b16 %v475, %v473
    %v598 = vpack.c.b16 %v476, %v474
    %v599 = vpack.c.b16 %v479, %v477
    %v600 = vpack.c.b16 %v480, %v478
    %v601 = vpack.c.b16 %v483, %v481
    %v602 = vpack.c.b16 %v484, %v482
    %v603 = vpack.c.b16 %v487, %v485
    %v604 = vpack.c.b16 %v488, %v486
    %v605 = vpack.c.b16 %v491, %v489
    %v606 = vpack.c.b16 %v492, %v490
    %v607 = vpack.c.b16 %v495, %v493
    %v608 = vpack.c.b16 %v496, %v494
    %v609 = vpack.c.b16 %v499, %v497
    %v610 = vpack.c.b16 %v500, %v498
    %v611 = vpack.c.b16 %v503, %v501
    %v612 = vpack.c.b16 %v504, %v502
    %v613 = vpack.c.b16 %v507, %v505
    %v614 = vpack.c.b16 %v508, %v506
    %v615 = vpack.c.b16 %v511, %v509
    %v616 = vpack.c.b16 %v512, %v510
    %v617 = vpack.c.b16 %v515, %v513
    %v618 = vpack.c.b16 %v516, %v514
    %v619 = vpack.c.b16 %v519, %v517
    %v620 = vpack.c.b16 %v520, %v518
    %v621 = vpack.c.b16 %v523, %v521
    %v622 = vpack.c.b16 %v524, %v522
    %vm721 = vcmask 130048
    %v723 = vsel %vm721, %v224, 0
    %725 = vmatprep.subr.bf16.mxu0 %v540
    %726 = vmatpush1.bf16.msra.mxu0 %v539
    %727 = vmatprep.subr.bf16.mxu0 %v538
    %728 = vmatpush1.bf16.msra.mxu0 %v537
    %729 = vmatprep.subr.bf16.mxu0 %v536
    %730 = vmatpush1.bf16.msra.mxu0 %v535
    %731 = vmatprep.subr.bf16.mxu0 %v534
    %732 = vmatpush1.bf16.msra.mxu0 %v533
    %733 = vmatprep.subr.bf16.mxu0 %v532
    %734 = vmatpush1.bf16.msra.mxu0 %v531
    %735 = vmatprep.subr.bf16.mxu0 %v530
    %736 = vmatpush1.bf16.msra.mxu0 %v529
    %737 = vmatprep.subr.bf16.mxu0 %v528
    %738 = vmatpush1.bf16.msra.mxu0 %v527
    %739 = vmatprep.subr.bf16.mxu0 %v526
    %740 = vmatpush1.bf16.msra.mxu0 %v525
    %741 = vmatprep.subr.bf16.mxu0 %v556
    %742 = vmatpush2.bf16.msra.mxu0 %v555
    %743 = vmatprep.subr.bf16.mxu0 %v554
    %744 = vmatpush2.bf16.msra.mxu0 %v553
    %745 = vmatprep.subr.bf16.mxu0 %v552
    %746 = vmatpush2.bf16.msra.mxu0 %v551
    %747 = vmatprep.subr.bf16.mxu0 %v550
    %748 = vmatpush2.bf16.msra.mxu0 %v549
    %749 = vmatprep.subr.bf16.mxu0 %v548
    %750 = vmatpush2.bf16.msra.mxu0 %v547
    %751 = vmatprep.subr.bf16.mxu0 %v546
    %752 = vmatpush2.bf16.msra.mxu0 %v545
    %753 = vmatprep.subr.bf16.mxu0 %v544
    %754 = vmatpush2.bf16.msra.mxu0 %v543
    %755 = vmatprep.subr.bf16.mxu0 %v542
    %756 = vmatpush2.bf16.msra.mxu0 %v541
    %757 = vmatprep.mubr.bf16.mxu0 %v219
    %758 = vmatmul.mubr.bf16.gmra.mxu0 %v218
    %v759 = vpop.f32.mrf.mxu0
    %v760 = vadd.f32 %v202, %v759
    %v761 = vpop.f32.mrf.mxu0
    %v762 = vadd.f32 %v206, %v761
    %v763 = vpop.f32.mrf.mxu0
    %v764 = vpop.f32.mrf.mxu0
    %765 = vdwg.mxu0
    %766 = vmatprep.subr.bf16.mxu0 %v572
    %767 = vmatpush1.bf16.msra.mxu0 %v571
    %768 = vmatprep.subr.bf16.mxu0 %v570
    %769 = vmatpush1.bf16.msra.mxu0 %v569
    %770 = vmatprep.subr.bf16.mxu0 %v568
    %771 = vmatpush1.bf16.msra.mxu0 %v567
    %772 = vmatprep.subr.bf16.mxu0 %v566
    %773 = vmatpush1.bf16.msra.mxu0 %v565
    %774 = vmatprep.subr.bf16.mxu0 %v564
    %775 = vmatpush1.bf16.msra.mxu0 %v563
    %776 = vmatprep.subr.bf16.mxu0 %v562
    %777 = vmatpush1.bf16.msra.mxu0 %v561
    %778 = vmatprep.subr.bf16.mxu0 %v560
    %779 = vmatpush1.bf16.msra.mxu0 %v559
    %780 = vmatprep.subr.bf16.mxu0 %v558
    %781 = vmatpush1.bf16.msra.mxu0 %v557
    %782 = vmatprep.subr.bf16.mxu0 %v588
    %783 = vmatpush2.bf16.msra.mxu0 %v587
    %784 = vmatprep.subr.bf16.mxu0 %v586
    %785 = vmatpush2.bf16.msra.mxu0 %v585
    %786 = vmatprep.subr.bf16.mxu0 %v584
    %787 = vmatpush2.bf16.msra.mxu0 %v583
    %788 = vmatprep.subr.bf16.mxu0 %v582
    %789 = vmatpush2.bf16.msra.mxu0 %v581
    %790 = vmatprep.subr.bf16.mxu0 %v580
    %791 = vmatpush2.bf16.msra.mxu0 %v579
    %792 = vmatprep.subr.bf16.mxu0 %v578
    %793 = vmatpush2.bf16.msra.mxu0 %v577
    %794 = vmatprep.subr.bf16.mxu0 %v576
    %795 = vmatpush2.bf16.msra.mxu0 %v575
    %796 = vmatprep.subr.bf16.mxu0 %v574
    %797 = vmatpush2.bf16.msra.mxu0 %v573
    %798 = vmatprep.mubr.bf16.mxu0 %v221
    %799 = vmatmul.mubr.bf16.gmra.mxu0 %v220
    %v800 = vpop.f32.mrf.mxu0
    %v801 = vadd.f32 %v760, %v800
    %v802 = vpop.f32.mrf.mxu0
    %v803 = vadd.f32 %v762, %v802
    %v804 = vpop.f32.mrf.mxu0
    %v805 = vpop.f32.mrf.mxu0
    %806 = vdwg.mxu0
    %807 = vmatprep.subr.bf16.mxu0 %v604
    %808 = vmatpush1.bf16.msra.mxu0 %v603
    %809 = vmatprep.subr.bf16.mxu0 %v602
    %810 = vmatpush1.bf16.msra.mxu0 %v601
    %811 = vmatprep.subr.bf16.mxu0 %v600
    %812 = vmatpush1.bf16.msra.mxu0 %v599
    %813 = vmatprep.subr.bf16.mxu0 %v598
    %814 = vmatpush1.bf16.msra.mxu0 %v597
    %815 = vmatprep.subr.bf16.mxu0 %v596
    %816 = vmatpush1.bf16.msra.mxu0 %v595
    %817 = vmatprep.subr.bf16.mxu0 %v594
    %818 = vmatpush1.bf16.msra.mxu0 %v593
    %819 = vmatprep.subr.bf16.mxu0 %v592
    %820 = vmatpush1.bf16.msra.mxu0 %v591
    %821 = vmatprep.subr.bf16.mxu0 %v590
    %822 = vmatpush1.bf16.msra.mxu0 %v589
    %823 = vmatprep.subr.bf16.mxu0 %v620
    %824 = vmatpush2.bf16.msra.mxu0 %v619
    %825 = vmatprep.subr.bf16.mxu0 %v618
    %826 = vmatpush2.bf16.msra.mxu0 %v617
    %827 = vmatprep.subr.bf16.mxu0 %v616
    %828 = vmatpush2.bf16.msra.mxu0 %v615
    %829 = vmatprep.subr.bf16.mxu0 %v614
    %830 = vmatpush2.bf16.msra.mxu0 %v613
    %831 = vmatprep.subr.bf16.mxu0 %v612
    %832 = vmatpush2.bf16.msra.mxu0 %v611
    %833 = vmatprep.subr.bf16.mxu0 %v610
    %834 = vmatpush2.bf16.msra.mxu0 %v609
    %835 = vmatprep.subr.bf16.mxu0 %v608
    %836 = vmatpush2.bf16.msra.mxu0 %v607
    %837 = vmatprep.subr.bf16.mxu0 %v606
    %838 = vmatpush2.bf16.msra.mxu0 %v605
    %839 = vmatprep.mubr.bf16.mxu0 %v223
    %840 = vmatmul.mubr.bf16.gmra.mxu0 %v222
    %v841 = vpop.f32.mrf.mxu0
    %v842 = vadd.f32 %v801, %v841
    %v843 = vpop.f32.mrf.mxu0
    %v844 = vadd.f32 %v803, %v843
    %v845 = vpop.f32.mrf.mxu0
    %v846 = vpop.f32.mrf.mxu0
    %847 = vdwg.mxu0
    %848 = vmatprep.subr.bf16.mxu0 0
    %849 = vmatpush1.bf16.msra.mxu0 0
    %850 = vmatprep.subr.bf16.mxu0 0
    %851 = vmatpush1.bf16.msra.mxu0 0
    %852 = vmatprep.subr.bf16.mxu0 0
    %853 = vmatpush1.bf16.msra.mxu0 0
    %854 = vmatprep.subr.bf16.mxu0 0
    %855 = vmatpush1.bf16.msra.mxu0 0
    %856 = vmatprep.subr.bf16.mxu0 0
    %857 = vmatpush1.bf16.msra.mxu0 0
    %858 = vmatprep.subr.bf16.mxu0 0
    %859 = vmatpush1.bf16.msra.mxu0 0
    %860 = vmatprep.subr.bf16.mxu0 0
    %861 = vmatpush1.bf16.msra.mxu0 0
    %862 = vmatprep.subr.bf16.mxu0 %v622
    %863 = vmatpush1.bf16.msra.mxu0 %v621
    %864 = vmatprep.subr.bf16.mxu0 0
    %865 = vmatpush2.bf16.msra.mxu0 0
    %866 = vmatprep.subr.bf16.mxu0 0
    %867 = vmatpush2.bf16.msra.mxu0 0
    %868 = vmatprep.subr.bf16.mxu0 0
    %869 = vmatpush2.bf16.msra.mxu0 0
    %870 = vmatprep.subr.bf16.mxu0 0
    %871 = vmatpush2.bf16.msra.mxu0 0
    %872 = vmatprep.subr.bf16.mxu0 0
    %873 = vmatpush2.bf16.msra.mxu0 0
    %874 = vmatprep.subr.bf16.mxu0 0
    %875 = vmatpush2.bf16.msra.mxu0 0
    %876 = vmatprep.subr.bf16.mxu0 0
    %877 = vmatpush2.bf16.msra.mxu0 0
    %878 = vmatprep.subr.bf16.mxu0 0
    %879 = vmatpush2.bf16.msra.mxu0 0
    %880 = vmatprep.mubr.bf16.mxu0 0
    %881 = vmatmul.mubr.bf16.gmra.mxu0 %v723
    %v882 = vpop.f32.mrf.mxu0
    %v883 = vadd.f32 %v842, %v882
    %v884 = vpop.f32.mrf.mxu0
    %v885 = vadd.f32 %v844, %v884
    %v886 = vpop.f32.mrf.mxu0
    %v887 = vpop.f32.mrf.mxu0
    %888 = vdwg.mxu0
    %v889 = vmax.f32 %v883, 0.0
    %v890 = vmax.f32 %v885, 0.0
    %v891 = vrot.slane %v889, 4
    %v892 = vadd.f32 %v889, %v891
    %v893 = vrot.slane %v892, 2
    %v894 = vadd.f32 %v892, %v893
    %v895 = vrot.slane %v894, 1
    %v896 = vadd.f32 %v894, %v895
    %v897 = vrot.slane %v890, 4
    %v898 = vadd.f32 %v890, %v897
    %v899 = vrot.slane %v898, 2
    %v900 = vadd.f32 %v898, %v899
    %v901 = vrot.slane %v900, 1
    %v902 = vadd.f32 %v900, %v901
    %v903 = vrcp.pop 8.0
    %v904 = vmul.f32 %v896, %v903
    %v905 = vmul.f32 %v902, %v903
    %v906 = vmul.f32 %v889, %v889
    %v907 = vmul.f32 %v890, %v890
    %v908 = vrot.slane %v906, 4
    %v909 = vadd.f32 %v906, %v908
    %v910 = vrot.slane %v909, 2
    %v911 = vadd.f32 %v909, %v910
    %v912 = vrot.slane %v911, 1
    %v913 = vadd.f32 %v911, %v912
    %v914 = vrot.slane %v907, 4
    %v915 = vadd.f32 %v907, %v914
    %v916 = vrot.slane %v915, 2
    %v917 = vadd.f32 %v915, %v916
    %v918 = vrot.slane %v917, 1
    %v919 = vadd.f32 %v917, %v918
    %v920 = vmul.f32 %v913, %v903
    %v921 = vmul.f32 %v919, %v903
    %v922 = vmul.f32 %v904, %v904
    %v923 = vmul.f32 %v905, %v905
    %v924 = vsub.f32 %v920, %v922
    %v925 = vsub.f32 %v921, %v923
    %v926 = vadd.f32 %v924, 0.0001
    %v927 = vadd.f32 %v925, 0.0001
    %v928 = vrsqrt.pop %v926
    %v929 = vrsqrt.pop %v927
    %v930 = vmul.f32 %v93, %v928
    %v931 = vmul.f32 %v94, %v929
    %v932 = vmul.f32 %v904, %v930
    %v933 = vmul.f32 %v905, %v931
    %v936 = vrot.slane %v932, 7
    %v937 = vrot.slane %v933, 7
    %v940 = vsub.f32 %v93, %v936
    %v941 = vsub.f32 %v94, %v937
    %v942 = vlaneseq
    %v943 = vshrl.u32 %v942, 7
    %v944 = vsub.s32 1, %v943
    %v945 = vrot.slane %v930, %v944
    %v946 = vlaneseq
    %v947 = vshrl.u32 %v946, 7
    %v948 = vsub.s32 1, %v947
    %v949 = vrot.slane %v931, %v948
    %v950 = vmul.f32 %v889, %v945
    %v951 = vmul.f32 %v890, %v949
    %v952 = vlaneseq
    %v953 = vshrl.u32 %v952, 7
    %v954 = vsub.s32 2, %v953
    %v955 = vrot.slane %v940, %v954
    %v956 = vlaneseq
    %v957 = vshrl.u32 %v956, 7
    %v958 = vsub.s32 2, %v957
    %v959 = vrot.slane %v941, %v958
    %v960 = vadd.f32 %v950, %v955
    %v961 = vadd.f32 %v951, %v959
    %s962 = smul.u32 4, 32
    %s963 = smul.u32 %s962, 2
    %s964 = sshll.u32 %s963, 4
    %965 = dma.done [#allocation5], %s964
    %v966 = vpack.c.bf16 %v960, %v960
    %v967 = vpack.c.bf16 %v961, %v961
    %v968 = vld [vmem:[#allocation2] sm:$0xff]
    %v969 = vld [vmem:[#allocation2 + $0x8] sm:$0xff]
    %v970 = vld [vmem:[#allocation2 + $0x10] sm:$0xff]
    %v971 = vld [vmem:[#allocation2 + $0x18] sm:$0xff]
    %v972 = vld [vmem:[#allocation2 + $0x20] sm:$0xff]
    %v973 = vld [vmem:[#allocation2 + $0x28] sm:$0xff]
    %v974 = vld [vmem:[#allocation2 + $0x30] sm:$0xff]
    %v975 = vld [vmem:[#allocation2 + $0x38] sm:$0xff]
    %v976 = vld [vmem:[#allocation2 + $0x40] sm:$0xff]
    %v977 = vld [vmem:[#allocation2 + $0x48] sm:$0xff]
    %v978 = vld [vmem:[#allocation2 + $0x50] sm:$0xff]
    %v979 = vld [vmem:[#allocation2 + $0x58] sm:$0xff]
    %v980 = vld [vmem:[#allocation2 + $0x60] sm:$0xff]
    %v981 = vld [vmem:[#allocation2 + $0x68] sm:$0xff]
    %v982 = vld [vmem:[#allocation2 + $0x70] sm:$0xff]
    %v983 = vld [vmem:[#allocation2 + $0x78] sm:$0xff]
    %v984 = vld [vmem:[#allocation2 + $0x80] sm:$0xff]
    %v985 = vld [vmem:[#allocation2 + $0x88] sm:$0xff]
    %v986 = vld [vmem:[#allocation2 + $0x90] sm:$0xff]
    %v987 = vld [vmem:[#allocation2 + $0x98] sm:$0xff]
    %v988 = vld [vmem:[#allocation2 + $0xa0] sm:$0xff]
    %v989 = vld [vmem:[#allocation2 + $0xa8] sm:$0xff]
    %v990 = vld [vmem:[#allocation2 + $0xb0] sm:$0xff]
    %v991 = vld [vmem:[#allocation2 + $0xb8] sm:$0xff]
    %v992 = vld [vmem:[#allocation2 + $0xc0] sm:$0xff]
    %v993 = vld [vmem:[#allocation2 + $0xc8] sm:$0xff]
    %v994 = vld [vmem:[#allocation2 + $0xd0] sm:$0xff]
    %v995 = vld [vmem:[#allocation2 + $0xd8] sm:$0xff]
    %v996 = vld [vmem:[#allocation2 + $0xe0] sm:$0xff]
    %v997 = vld [vmem:[#allocation2 + $0xe8] sm:$0xff]
    %v998 = vld [vmem:[#allocation2 + $0xf0] sm:$0xff]
    %v999 = vld [vmem:[#allocation2 + $0xf8] sm:$0xff]
    %v1000 = vlaneseq
    %v1001 = vshrl.u32 %v1000, 7
    %v1002 = vsub.s32 3, %v1001
    %v1003 = vrot.slane %v93, %v1002
    %v1004 = vlaneseq
    %v1005 = vshrl.u32 %v1004, 7
    %v1006 = vsub.s32 3, %v1005
    %v1007 = vrot.slane %v94, %v1006
    %v1040 = vunpack.c.l.b16 %v968
    %v1041 = vunpack.c.h.b16 %v968
    %v1042 = vunpack.c.l.b16 %v969
    %v1043 = vunpack.c.h.b16 %v969
    %v1044 = vunpack.c.l.b16 %v970
    %v1045 = vunpack.c.h.b16 %v970
    %v1046 = vunpack.c.l.b16 %v971
    %v1047 = vunpack.c.h.b16 %v971
    %v1048 = vunpack.c.l.b16 %v972
    %v1049 = vunpack.c.h.b16 %v972
    %v1050 = vunpack.c.l.b16 %v973
    %v1051 = vunpack.c.h.b16 %v973
    %v1052 = vunpack.c.l.b16 %v974
    %v1053 = vunpack.c.h.b16 %v974
    %v1054 = vunpack.c.l.b16 %v975
    %v1055 = vunpack.c.h.b16 %v975
    %v1056 = vunpack.c.l.b16 %v976
    %v1057 = vunpack.c.h.b16 %v976
    %v1058 = vunpack.c.l.b16 %v977
    %v1059 = vunpack.c.h.b16 %v977
    %v1060 = vunpack.c.l.b16 %v978
    %v1061 = vunpack.c.h.b16 %v978
    %v1062 = vunpack.c.l.b16 %v979
    %v1063 = vunpack.c.h.b16 %v979
    %v1064 = vunpack.c.l.b16 %v980
    %v1065 = vunpack.c.h.b16 %v980
    %v1066 = vunpack.c.l.b16 %v981
    %v1067 = vunpack.c.h.b16 %v981
    %v1068 = vunpack.c.l.b16 %v982
    %v1069 = vunpack.c.h.b16 %v982
    %v1070 = vunpack.c.l.b16 %v983
    %v1071 = vunpack.c.h.b16 %v983
    %v1072 = vunpack.c.l.b16 %v984
    %v1073 = vunpack.c.h.b16 %v984
    %v1074 = vunpack.c.l.b16 %v985
    %v1075 = vunpack.c.h.b16 %v985
    %v1076 = vunpack.c.l.b16 %v986
    %v1077 = vunpack.c.h.b16 %v986
    %v1078 = vunpack.c.l.b16 %v987
    %v1079 = vunpack.c.h.b16 %v987
    %v1080 = vunpack.c.l.b16 %v988
    %v1081 = vunpack.c.h.b16 %v988
    %v1082 = vunpack.c.l.b16 %v989
    %v1083 = vunpack.c.h.b16 %v989
    %v1084 = vunpack.c.l.b16 %v990
    %v1085 = vunpack.c.h.b16 %v990
    %v1086 = vunpack.c.l.b16 %v991
    %v1087 = vunpack.c.h.b16 %v991
    %v1088 = vunpack.c.l.b16 %v992
    %v1089 = vunpack.c.h.b16 %v992
    %v1090 = vunpack.c.l.b16 %v993
    %v1091 = vunpack.c.h.b16 %v993
    %v1092 = vunpack.c.l.b16 %v994
    %v1093 = vunpack.c.h.b16 %v994
    %v1094 = vunpack.c.l.b16 %v995
    %v1095 = vunpack.c.h.b16 %v995
    %v1096 = vunpack.c.l.b16 %v996
    %v1097 = vunpack.c.h.b16 %v996
    %v1098 = vunpack.c.l.b16 %v997
    %v1099 = vunpack.c.h.b16 %v997
    %v1100 = vunpack.c.l.b16 %v998
    %v1101 = vunpack.c.h.b16 %v998
    %v1102 = vunpack.c.l.b16 %v999
    %v1103 = vunpack.c.h.b16 %v999
    %v1104 = vpack.c.b16 %v1042, %v1040
    %v1105 = vpack.c.b16 %v1043, %v1041
    %v1106 = vpack.c.b16 %v1046, %v1044
    %v1107 = vpack.c.b16 %v1047, %v1045
    %v1108 = vpack.c.b16 %v1050, %v1048
    %v1109 = vpack.c.b16 %v1051, %v1049
    %v1110 = vpack.c.b16 %v1054, %v1052
    %v1111 = vpack.c.b16 %v1055, %v1053
    %v1112 = vpack.c.b16 %v1058, %v1056
    %v1113 = vpack.c.b16 %v1059, %v1057
    %v1114 = vpack.c.b16 %v1062, %v1060
    %v1115 = vpack.c.b16 %v1063, %v1061
    %v1116 = vpack.c.b16 %v1066, %v1064
    %v1117 = vpack.c.b16 %v1067, %v1065
    %v1118 = vpack.c.b16 %v1070, %v1068
    %v1119 = vpack.c.b16 %v1071, %v1069
    %v1120 = vpack.c.b16 %v1074, %v1072
    %v1121 = vpack.c.b16 %v1075, %v1073
    %v1122 = vpack.c.b16 %v1078, %v1076
    %v1123 = vpack.c.b16 %v1079, %v1077
    %v1124 = vpack.c.b16 %v1082, %v1080
    %v1125 = vpack.c.b16 %v1083, %v1081
    %v1126 = vpack.c.b16 %v1086, %v1084
    %v1127 = vpack.c.b16 %v1087, %v1085
    %v1128 = vpack.c.b16 %v1090, %v1088
    %v1129 = vpack.c.b16 %v1091, %v1089
    %v1130 = vpack.c.b16 %v1094, %v1092
    %v1131 = vpack.c.b16 %v1095, %v1093
    %v1132 = vpack.c.b16 %v1098, %v1096
    %v1133 = vpack.c.b16 %v1099, %v1097
    %v1134 = vpack.c.b16 %v1102, %v1100
    %v1135 = vpack.c.b16 %v1103, %v1101
    %1168 = vmatprep.subr.bf16.mxu0 %v1119
    %1169 = vmatpush1.bf16.msra.mxu0 %v1118
    %1170 = vmatprep.subr.bf16.mxu0 %v1117
    %1171 = vmatpush1.bf16.msra.mxu0 %v1116
    %1172 = vmatprep.subr.bf16.mxu0 %v1115
    %1173 = vmatpush1.bf16.msra.mxu0 %v1114
    %1174 = vmatprep.subr.bf16.mxu0 %v1113
    %1175 = vmatpush1.bf16.msra.mxu0 %v1112
    %1176 = vmatprep.subr.bf16.mxu0 %v1111
    %1177 = vmatpush1.bf16.msra.mxu0 %v1110
    %1178 = vmatprep.subr.bf16.mxu0 %v1109
    %1179 = vmatpush1.bf16.msra.mxu0 %v1108
    %1180 = vmatprep.subr.bf16.mxu0 %v1107
    %1181 = vmatpush1.bf16.msra.mxu0 %v1106
    %1182 = vmatprep.subr.bf16.mxu0 %v1105
    %1183 = vmatpush1.bf16.msra.mxu0 %v1104
    %1184 = vmatprep.subr.bf16.mxu0 %v1135
    %1185 = vmatpush2.bf16.msra.mxu0 %v1134
    %1186 = vmatprep.subr.bf16.mxu0 %v1133
    %1187 = vmatpush2.bf16.msra.mxu0 %v1132
    %1188 = vmatprep.subr.bf16.mxu0 %v1131
    %1189 = vmatpush2.bf16.msra.mxu0 %v1130
    %1190 = vmatprep.subr.bf16.mxu0 %v1129
    %1191 = vmatpush2.bf16.msra.mxu0 %v1128
    %1192 = vmatprep.subr.bf16.mxu0 %v1127
    %1193 = vmatpush2.bf16.msra.mxu0 %v1126
    %1194 = vmatprep.subr.bf16.mxu0 %v1125
    %1195 = vmatpush2.bf16.msra.mxu0 %v1124
    %1196 = vmatprep.subr.bf16.mxu0 %v1123
    %1197 = vmatpush2.bf16.msra.mxu0 %v1122
    %1198 = vmatprep.subr.bf16.mxu0 %v1121
    %1199 = vmatpush2.bf16.msra.mxu0 %v1120
    %1200 = vmatprep.mubr.bf16.mxu0 %v967
    %1201 = vmatmul.mubr.bf16.gmra.mxu0 %v966
    %v1202 = vpop.f32.mrf.mxu0
    %v1203 = vadd.f32 %v1003, %v1202
    %v1204 = vpop.f32.mrf.mxu0
    %v1205 = vadd.f32 %v1007, %v1204
    %v1206 = vpop.f32.mrf.mxu0
    %v1207 = vpop.f32.mrf.mxu0
    %1208 = vdwg.mxu0
    %v1209 = vmax.f32 %v1203, 0.0
    %v1210 = vmax.f32 %v1205, 0.0
    %v1211 = vrot.slane %v1209, 4
    %v1212 = vadd.f32 %v1209, %v1211
    %v1213 = vrot.slane %v1212, 2
    %v1214 = vadd.f32 %v1212, %v1213
    %v1215 = vrot.slane %v1214, 1
    %v1216 = vadd.f32 %v1214, %v1215
    %v1217 = vrot.slane %v1210, 4
    %v1218 = vadd.f32 %v1210, %v1217
    %v1219 = vrot.slane %v1218, 2
    %v1220 = vadd.f32 %v1218, %v1219
    %v1221 = vrot.slane %v1220, 1
    %v1222 = vadd.f32 %v1220, %v1221
    %v1223 = vmul.f32 %v1216, %v903
    %v1224 = vmul.f32 %v1222, %v903
    %v1225 = vmul.f32 %v1209, %v1209
    %v1226 = vmul.f32 %v1210, %v1210
    %v1227 = vrot.slane %v1225, 4
    %v1228 = vadd.f32 %v1225, %v1227
    %v1229 = vrot.slane %v1228, 2
    %v1230 = vadd.f32 %v1228, %v1229
    %v1231 = vrot.slane %v1230, 1
    %v1232 = vadd.f32 %v1230, %v1231
    %v1233 = vrot.slane %v1226, 4
    %v1234 = vadd.f32 %v1226, %v1233
    %v1235 = vrot.slane %v1234, 2
    %v1236 = vadd.f32 %v1234, %v1235
    %v1237 = vrot.slane %v1236, 1
    %v1238 = vadd.f32 %v1236, %v1237
    %v1239 = vmul.f32 %v1232, %v903
    %v1240 = vmul.f32 %v1238, %v903
    %v1241 = vmul.f32 %v1223, %v1223
    %v1242 = vmul.f32 %v1224, %v1224
    %v1243 = vsub.f32 %v1239, %v1241
    %v1244 = vsub.f32 %v1240, %v1242
    %v1245 = vadd.f32 %v1243, 0.0001
    %v1246 = vadd.f32 %v1244, 0.0001
    %v1247 = vrsqrt.pop %v1245
    %v1248 = vrsqrt.pop %v1246
    %v1249 = vmul.f32 %v93, %v1247
    %v1250 = vmul.f32 %v94, %v1248
    %v1251 = vmul.f32 %v1223, %v1249
    %v1252 = vmul.f32 %v1224, %v1250
    %v1255 = vrot.slane %v1251, 7
    %v1256 = vrot.slane %v1252, 7
    %v1259 = vsub.f32 %v93, %v1255
    %v1260 = vsub.f32 %v94, %v1256
    %v1261 = vlaneseq
    %v1262 = vshrl.u32 %v1261, 7
    %v1263 = vsub.s32 4, %v1262
    %v1264 = vrot.slane %v1249, %v1263
    %v1265 = vlaneseq
    %v1266 = vshrl.u32 %v1265, 7
    %v1267 = vsub.s32 4, %v1266
    %v1268 = vrot.slane %v1250, %v1267
    %v1269 = vmul.f32 %v1209, %v1264
    %v1270 = vmul.f32 %v1210, %v1268
    %v1271 = vlaneseq
    %v1272 = vshrl.u32 %v1271, 7
    %v1273 = vsub.s32 5, %v1272
    %v1274 = vrot.slane %v1259, %v1273
    %v1275 = vlaneseq
    %v1276 = vshrl.u32 %v1275, 7
    %v1277 = vsub.s32 5, %v1276
    %v1278 = vrot.slane %v1260, %v1277
    %v1279 = vadd.f32 %v1269, %v1274
    %v1280 = vadd.f32 %v1270, %v1278
    %s1281 = sshll.u32 %s963, 4
    %1282 = dma.done %s69, %s1281
    %v1283 = vpack.c.bf16 %v1279, %v1279
    %v1284 = vpack.c.bf16 %v1280, %v1280
    %v1285 = vld [vmem:[#allocation3] sm:$0xff]
    %v1286 = vld [vmem:[#allocation3 + $0x8] sm:$0xff]
    %v1287 = vld [vmem:[#allocation3 + $0x10] sm:$0xff]
    %v1288 = vld [vmem:[#allocation3 + $0x18] sm:$0xff]
    %v1289 = vld [vmem:[#allocation3 + $0x20] sm:$0xff]
    %v1290 = vld [vmem:[#allocation3 + $0x28] sm:$0xff]
    %v1291 = vld [vmem:[#allocation3 + $0x30] sm:$0xff]
    %v1292 = vld [vmem:[#allocation3 + $0x38] sm:$0xff]
    %v1293 = vld [vmem:[#allocation3 + $0x40] sm:$0xff]
    %v1294 = vld [vmem:[#allocation3 + $0x48] sm:$0xff]
    %v1295 = vld [vmem:[#allocation3 + $0x50] sm:$0xff]
    %v1296 = vld [vmem:[#allocation3 + $0x58] sm:$0xff]
    %v1297 = vld [vmem:[#allocation3 + $0x60] sm:$0xff]
    %v1298 = vld [vmem:[#allocation3 + $0x68] sm:$0xff]
    %v1299 = vld [vmem:[#allocation3 + $0x70] sm:$0xff]
    %v1300 = vld [vmem:[#allocation3 + $0x78] sm:$0xff]
    %v1301 = vld [vmem:[#allocation3 + $0x80] sm:$0xff]
    %v1302 = vld [vmem:[#allocation3 + $0x88] sm:$0xff]
    %v1303 = vld [vmem:[#allocation3 + $0x90] sm:$0xff]
    %v1304 = vld [vmem:[#allocation3 + $0x98] sm:$0xff]
    %v1305 = vld [vmem:[#allocation3 + $0xa0] sm:$0xff]
    %v1306 = vld [vmem:[#allocation3 + $0xa8] sm:$0xff]
    %v1307 = vld [vmem:[#allocation3 + $0xb0] sm:$0xff]
    %v1308 = vld [vmem:[#allocation3 + $0xb8] sm:$0xff]
    %v1309 = vld [vmem:[#allocation3 + $0xc0] sm:$0xff]
    %v1310 = vld [vmem:[#allocation3 + $0xc8] sm:$0xff]
    %v1311 = vld [vmem:[#allocation3 + $0xd0] sm:$0xff]
    %v1312 = vld [vmem:[#allocation3 + $0xd8] sm:$0xff]
    %v1313 = vld [vmem:[#allocation3 + $0xe0] sm:$0xff]
    %v1314 = vld [vmem:[#allocation3 + $0xe8] sm:$0xff]
    %v1315 = vld [vmem:[#allocation3 + $0xf0] sm:$0xff]
    %v1316 = vld [vmem:[#allocation3 + $0xf8] sm:$0xff]
    %v1317 = vlaneseq
    %v1318 = vshrl.u32 %v1317, 7
    %v1319 = vsub.s32 6, %v1318
    %v1320 = vrot.slane %v93, %v1319
    %v1321 = vlaneseq
    %v1322 = vshrl.u32 %v1321, 7
    %v1323 = vsub.s32 6, %v1322
    %v1324 = vrot.slane %v94, %v1323
    %v1357 = vunpack.c.l.b16 %v1285
    %v1358 = vunpack.c.h.b16 %v1285
    %v1359 = vunpack.c.l.b16 %v1286
    %v1360 = vunpack.c.h.b16 %v1286
    %v1361 = vunpack.c.l.b16 %v1287
    %v1362 = vunpack.c.h.b16 %v1287
    %v1363 = vunpack.c.l.b16 %v1288
    %v1364 = vunpack.c.h.b16 %v1288
    %v1365 = vunpack.c.l.b16 %v1289
    %v1366 = vunpack.c.h.b16 %v1289
    %v1367 = vunpack.c.l.b16 %v1290
    %v1368 = vunpack.c.h.b16 %v1290
    %v1369 = vunpack.c.l.b16 %v1291
    %v1370 = vunpack.c.h.b16 %v1291
    %v1371 = vunpack.c.l.b16 %v1292
    %v1372 = vunpack.c.h.b16 %v1292
    %v1373 = vunpack.c.l.b16 %v1293
    %v1374 = vunpack.c.h.b16 %v1293
    %v1375 = vunpack.c.l.b16 %v1294
    %v1376 = vunpack.c.h.b16 %v1294
    %v1377 = vunpack.c.l.b16 %v1295
    %v1378 = vunpack.c.h.b16 %v1295
    %v1379 = vunpack.c.l.b16 %v1296
    %v1380 = vunpack.c.h.b16 %v1296
    %v1381 = vunpack.c.l.b16 %v1297
    %v1382 = vunpack.c.h.b16 %v1297
    %v1383 = vunpack.c.l.b16 %v1298
    %v1384 = vunpack.c.h.b16 %v1298
    %v1385 = vunpack.c.l.b16 %v1299
    %v1386 = vunpack.c.h.b16 %v1299
    %v1387 = vunpack.c.l.b16 %v1300
    %v1388 = vunpack.c.h.b16 %v1300
    %v1389 = vunpack.c.l.b16 %v1301
    %v1390 = vunpack.c.h.b16 %v1301
    %v1391 = vunpack.c.l.b16 %v1302
    %v1392 = vunpack.c.h.b16 %v1302
    %v1393 = vunpack.c.l.b16 %v1303
    %v1394 = vunpack.c.h.b16 %v1303
    %v1395 = vunpack.c.l.b16 %v1304
    %v1396 = vunpack.c.h.b16 %v1304
    %v1397 = vunpack.c.l.b16 %v1305
    %v1398 = vunpack.c.h.b16 %v1305
    %v1399 = vunpack.c.l.b16 %v1306
    %v1400 = vunpack.c.h.b16 %v1306
    %v1401 = vunpack.c.l.b16 %v1307
    %v1402 = vunpack.c.h.b16 %v1307
    %v1403 = vunpack.c.l.b16 %v1308
    %v1404 = vunpack.c.h.b16 %v1308
    %v1405 = vunpack.c.l.b16 %v1309
    %v1406 = vunpack.c.h.b16 %v1309
    %v1407 = vunpack.c.l.b16 %v1310
    %v1408 = vunpack.c.h.b16 %v1310
    %v1409 = vunpack.c.l.b16 %v1311
    %v1410 = vunpack.c.h.b16 %v1311
    %v1411 = vunpack.c.l.b16 %v1312
    %v1412 = vunpack.c.h.b16 %v1312
    %v1413 = vunpack.c.l.b16 %v1313
    %v1414 = vunpack.c.h.b16 %v1313
    %v1415 = vunpack.c.l.b16 %v1314
    %v1416 = vunpack.c.h.b16 %v1314
    %v1417 = vunpack.c.l.b16 %v1315
    %v1418 = vunpack.c.h.b16 %v1315
    %v1419 = vunpack.c.l.b16 %v1316
    %v1420 = vunpack.c.h.b16 %v1316
    %v1421 = vpack.c.b16 %v1359, %v1357
    %v1422 = vpack.c.b16 %v1360, %v1358
    %v1423 = vpack.c.b16 %v1363, %v1361
    %v1424 = vpack.c.b16 %v1364, %v1362
    %v1425 = vpack.c.b16 %v1367, %v1365
    %v1426 = vpack.c.b16 %v1368, %v1366
    %v1427 = vpack.c.b16 %v1371, %v1369
    %v1428 = vpack.c.b16 %v1372, %v1370
    %v1429 = vpack.c.b16 %v1375, %v1373
    %v1430 = vpack.c.b16 %v1376, %v1374
    %v1431 = vpack.c.b16 %v1379, %v1377
    %v1432 = vpack.c.b16 %v1380, %v1378
    %v1433 = vpack.c.b16 %v1383, %v1381
    %v1434 = vpack.c.b16 %v1384, %v1382
    %v1435 = vpack.c.b16 %v1387, %v1385
    %v1436 = vpack.c.b16 %v1388, %v1386
    %v1437 = vpack.c.b16 %v1391, %v1389
    %v1438 = vpack.c.b16 %v1392, %v1390
    %v1439 = vpack.c.b16 %v1395, %v1393
    %v1440 = vpack.c.b16 %v1396, %v1394
    %v1441 = vpack.c.b16 %v1399, %v1397
    %v1442 = vpack.c.b16 %v1400, %v1398
    %v1443 = vpack.c.b16 %v1403, %v1401
    %v1444 = vpack.c.b16 %v1404, %v1402
    %v1445 = vpack.c.b16 %v1407, %v1405
    %v1446 = vpack.c.b16 %v1408, %v1406
    %v1447 = vpack.c.b16 %v1411, %v1409
    %v1448 = vpack.c.b16 %v1412, %v1410
    %v1449 = vpack.c.b16 %v1415, %v1413
    %v1450 = vpack.c.b16 %v1416, %v1414
    %v1451 = vpack.c.b16 %v1419, %v1417
    %v1452 = vpack.c.b16 %v1420, %v1418
    %1485 = vmatprep.subr.bf16.mxu0 %v1436
    %1486 = vmatpush1.bf16.msra.mxu0 %v1435
    %1487 = vmatprep.subr.bf16.mxu0 %v1434
    %1488 = vmatpush1.bf16.msra.mxu0 %v1433
    %1489 = vmatprep.subr.bf16.mxu0 %v1432
    %1490 = vmatpush1.bf16.msra.mxu0 %v1431
    %1491 = vmatprep.subr.bf16.mxu0 %v1430
    %1492 = vmatpush1.bf16.msra.mxu0 %v1429
    %1493 = vmatprep.subr.bf16.mxu0 %v1428
    %1494 = vmatpush1.bf16.msra.mxu0 %v1427
    %1495 = vmatprep.subr.bf16.mxu0 %v1426
    %1496 = vmatpush1.bf16.msra.mxu0 %v1425
    %1497 = vmatprep.subr.bf16.mxu0 %v1424
    %1498 = vmatpush1.bf16.msra.mxu0 %v1423
    %1499 = vmatprep.subr.bf16.mxu0 %v1422
    %1500 = vmatpush1.bf16.msra.mxu0 %v1421
    %1501 = vmatprep.subr.bf16.mxu0 %v1452
    %1502 = vmatpush2.bf16.msra.mxu0 %v1451
    %1503 = vmatprep.subr.bf16.mxu0 %v1450
    %1504 = vmatpush2.bf16.msra.mxu0 %v1449
    %1505 = vmatprep.subr.bf16.mxu0 %v1448
    %1506 = vmatpush2.bf16.msra.mxu0 %v1447
    %1507 = vmatprep.subr.bf16.mxu0 %v1446
    %1508 = vmatpush2.bf16.msra.mxu0 %v1445
    %1509 = vmatprep.subr.bf16.mxu0 %v1444
    %1510 = vmatpush2.bf16.msra.mxu0 %v1443
    %1511 = vmatprep.subr.bf16.mxu0 %v1442
    %1512 = vmatpush2.bf16.msra.mxu0 %v1441
    %1513 = vmatprep.subr.bf16.mxu0 %v1440
    %1514 = vmatpush2.bf16.msra.mxu0 %v1439
    %1515 = vmatprep.subr.bf16.mxu0 %v1438
    %1516 = vmatpush2.bf16.msra.mxu0 %v1437
    %1517 = vmatprep.mubr.bf16.mxu0 %v1284
    %1518 = vmatmul.mubr.bf16.gmra.mxu0 %v1283
    %v1519 = vpop.f32.mrf.mxu0
    %v1520 = vadd.f32 %v1320, %v1519
    %v1521 = vpop.f32.mrf.mxu0
    %v1522 = vadd.f32 %v1324, %v1521
    %v1523 = vpop.f32.mrf.mxu0
    %v1524 = vpop.f32.mrf.mxu0
    %1525 = vdwg.mxu0
    %v1526 = vmax.f32 %v1520, 0.0
    %v1527 = vmax.f32 %v1522, 0.0
    %v1528 = vrot.slane %v1526, 4
    %v1529 = vadd.f32 %v1526, %v1528
    %v1530 = vrot.slane %v1529, 2
    %v1531 = vadd.f32 %v1529, %v1530
    %v1532 = vrot.slane %v1531, 1
    %v1533 = vadd.f32 %v1531, %v1532
    %v1534 = vrot.slane %v1527, 4
    %v1535 = vadd.f32 %v1527, %v1534
    %v1536 = vrot.slane %v1535, 2
    %v1537 = vadd.f32 %v1535, %v1536
    %v1538 = vrot.slane %v1537, 1
    %v1539 = vadd.f32 %v1537, %v1538
    %v1540 = vmul.f32 %v1533, %v903
    %v1541 = vmul.f32 %v1539, %v903
    %v1542 = vmul.f32 %v1526, %v1526
    %v1543 = vmul.f32 %v1527, %v1527
    %v1544 = vrot.slane %v1542, 4
    %v1545 = vadd.f32 %v1542, %v1544
    %v1546 = vrot.slane %v1545, 2
    %v1547 = vadd.f32 %v1545, %v1546
    %v1548 = vrot.slane %v1547, 1
    %v1549 = vadd.f32 %v1547, %v1548
    %v1550 = vrot.slane %v1543, 4
    %v1551 = vadd.f32 %v1543, %v1550
    %v1552 = vrot.slane %v1551, 2
    %v1553 = vadd.f32 %v1551, %v1552
    %v1554 = vrot.slane %v1553, 1
    %v1555 = vadd.f32 %v1553, %v1554
    %v1556 = vmul.f32 %v1549, %v903
    %v1557 = vmul.f32 %v1555, %v903
    %v1558 = vmul.f32 %v1540, %v1540
    %v1559 = vmul.f32 %v1541, %v1541
    %v1560 = vsub.f32 %v1556, %v1558
    %v1561 = vsub.f32 %v1557, %v1559
    %v1562 = vadd.f32 %v1560, 0.0001
    %v1563 = vadd.f32 %v1561, 0.0001
    %v1564 = vrsqrt.pop %v1562
    %v1565 = vrsqrt.pop %v1563
    %v1566 = vmul.f32 %v93, %v1564
    %v1567 = vmul.f32 %v94, %v1565
    %v1568 = vmul.f32 %v1540, %v1566
    %v1569 = vmul.f32 %v1541, %v1567
    %v1572 = vrot.slane %v1568, 7
    %v1573 = vrot.slane %v1569, 7
    %v1576 = vsub.f32 %v95, %v1572
    %v1577 = vsub.f32 %v96, %v1573
    %v1578 = vlaneseq
    %v1579 = vshrl.u32 %v1578, 7
    %v1580 = vsub.s32 7, %v1579
    %v1581 = vrot.slane %v1566, %v1580
    %v1582 = vlaneseq
    %v1583 = vshrl.u32 %v1582, 7
    %v1584 = vsub.s32 7, %v1583
    %v1585 = vrot.slane %v1567, %v1584
    %v1586 = vmul.f32 %v1526, %v1581
    %v1587 = vmul.f32 %v1527, %v1585
    %v1588 = vlaneseq
    %v1589 = vshrl.u32 %v1588, 7
    %v1590 = vsub.s32 0, %v1589
    %v1591 = vrot.slane %v1576, %v1590
    %v1592 = vlaneseq
    %v1593 = vshrl.u32 %v1592, 7
    %v1594 = vsub.s32 0, %v1593
    %v1595 = vrot.slane %v1577, %v1594
    %v1596 = vadd.f32 %v1586, %v1591
    %v1597 = vadd.f32 %v1587, %v1595
    %s1598 = smul.u32 %s962, 1
    %s1599 = sshll.u32 %s1598, 4
    %1600 = dma.done %s81, %s1599
    %v1601 = vpack.c.bf16 %v1596, %v1596
    %v1602 = vpack.c.bf16 %v1597, %v1597
    %v1603 = vld [vmem:[#allocation4] sm:$0xf]
    %v1604 = vld [vmem:[#allocation4 + $0x4] sm:$0xf]
    %v1605 = vld [vmem:[#allocation4 + $0x8] sm:$0xf]
    %v1606 = vld [vmem:[#allocation4 + $0xc] sm:$0xf]
    %v1607 = vld [vmem:[#allocation4 + $0x10] sm:$0xf]
    %v1608 = vld [vmem:[#allocation4 + $0x14] sm:$0xf]
    %v1609 = vld [vmem:[#allocation4 + $0x18] sm:$0xf]
    %v1610 = vld [vmem:[#allocation4 + $0x1c] sm:$0xf]
    %v1611 = vld [vmem:[#allocation4 + $0x20] sm:$0xf]
    %v1612 = vld [vmem:[#allocation4 + $0x24] sm:$0xf]
    %v1613 = vld [vmem:[#allocation4 + $0x28] sm:$0xf]
    %v1614 = vld [vmem:[#allocation4 + $0x2c] sm:$0xf]
    %v1615 = vld [vmem:[#allocation4 + $0x30] sm:$0xf]
    %v1616 = vld [vmem:[#allocation4 + $0x34] sm:$0xf]
    %v1617 = vld [vmem:[#allocation4 + $0x38] sm:$0xf]
    %v1618 = vld [vmem:[#allocation4 + $0x3c] sm:$0xf]
    %v1619 = vld [vmem:[#allocation4 + $0x40] sm:$0xf]
    %v1620 = vld [vmem:[#allocation4 + $0x44] sm:$0xf]
    %v1621 = vld [vmem:[#allocation4 + $0x48] sm:$0xf]
    %v1622 = vld [vmem:[#allocation4 + $0x4c] sm:$0xf]
    %v1623 = vld [vmem:[#allocation4 + $0x50] sm:$0xf]
    %v1624 = vld [vmem:[#allocation4 + $0x54] sm:$0xf]
    %v1625 = vld [vmem:[#allocation4 + $0x58] sm:$0xf]
    %v1626 = vld [vmem:[#allocation4 + $0x5c] sm:$0xf]
    %v1627 = vld [vmem:[#allocation4 + $0x60] sm:$0xf]
    %v1628 = vld [vmem:[#allocation4 + $0x64] sm:$0xf]
    %v1629 = vld [vmem:[#allocation4 + $0x68] sm:$0xf]
    %v1630 = vld [vmem:[#allocation4 + $0x6c] sm:$0xf]
    %v1631 = vld [vmem:[#allocation4 + $0x70] sm:$0xf]
    %v1632 = vld [vmem:[#allocation4 + $0x74] sm:$0xf]
    %v1633 = vld [vmem:[#allocation4 + $0x78] sm:$0xf]
    %v1634 = vld [vmem:[#allocation4 + $0x7c] sm:$0xf]
    %v1635 = vlaneseq
    %v1636 = vshrl.u32 %v1635, 7
    %v1637 = vsub.s32 1, %v1636
    %v1638 = vrot.slane %v95, %v1637
    %v1671 = vunpack.c.l.b16 %v1603
    %v1672 = vunpack.c.l.b16 %v1604
    %v1673 = vunpack.c.l.b16 %v1605
    %v1674 = vunpack.c.l.b16 %v1606
    %v1675 = vunpack.c.l.b16 %v1607
    %v1676 = vunpack.c.l.b16 %v1608
    %v1677 = vunpack.c.l.b16 %v1609
    %v1678 = vunpack.c.l.b16 %v1610
    %v1679 = vunpack.c.l.b16 %v1611
    %v1680 = vunpack.c.l.b16 %v1612
    %v1681 = vunpack.c.l.b16 %v1613
    %v1682 = vunpack.c.l.b16 %v1614
    %v1683 = vunpack.c.l.b16 %v1615
    %v1684 = vunpack.c.l.b16 %v1616
    %v1685 = vunpack.c.l.b16 %v1617
    %v1686 = vunpack.c.l.b16 %v1618
    %v1687 = vunpack.c.l.b16 %v1619
    %v1688 = vunpack.c.l.b16 %v1620
    %v1689 = vunpack.c.l.b16 %v1621
    %v1690 = vunpack.c.l.b16 %v1622
    %v1691 = vunpack.c.l.b16 %v1623
    %v1692 = vunpack.c.l.b16 %v1624
    %v1693 = vunpack.c.l.b16 %v1625
    %v1694 = vunpack.c.l.b16 %v1626
    %v1695 = vunpack.c.l.b16 %v1627
    %v1696 = vunpack.c.l.b16 %v1628
    %v1697 = vunpack.c.l.b16 %v1629
    %v1698 = vunpack.c.l.b16 %v1630
    %v1699 = vunpack.c.l.b16 %v1631
    %v1700 = vunpack.c.l.b16 %v1632
    %v1701 = vunpack.c.l.b16 %v1633
    %v1702 = vunpack.c.l.b16 %v1634
    %v1703 = vpack.c.b16 %v1672, %v1671
    %v1704 = vpack.c.b16 %v1674, %v1673
    %v1705 = vpack.c.b16 %v1676, %v1675
    %v1706 = vpack.c.b16 %v1678, %v1677
    %v1707 = vpack.c.b16 %v1680, %v1679
    %v1708 = vpack.c.b16 %v1682, %v1681
    %v1709 = vpack.c.b16 %v1684, %v1683
    %v1710 = vpack.c.b16 %v1686, %v1685
    %v1711 = vpack.c.b16 %v1688, %v1687
    %v1712 = vpack.c.b16 %v1690, %v1689
    %v1713 = vpack.c.b16 %v1692, %v1691
    %v1714 = vpack.c.b16 %v1694, %v1693
    %v1715 = vpack.c.b16 %v1696, %v1695
    %v1716 = vpack.c.b16 %v1698, %v1697
    %v1717 = vpack.c.b16 %v1700, %v1699
    %v1718 = vpack.c.b16 %v1702, %v1701
    %1735 = vmatprep.subr.bf16.mxu0 0
    %1736 = vmatpush1.bf16.msra.mxu0 %v1710
    %1737 = vmatprep.subr.bf16.mxu0 0
    %1738 = vmatpush1.bf16.msra.mxu0 %v1709
    %1739 = vmatprep.subr.bf16.mxu0 0
    %1740 = vmatpush1.bf16.msra.mxu0 %v1708
    %1741 = vmatprep.subr.bf16.mxu0 0
    %1742 = vmatpush1.bf16.msra.mxu0 %v1707
    %1743 = vmatprep.subr.bf16.mxu0 0
    %1744 = vmatpush1.bf16.msra.mxu0 %v1706
    %1745 = vmatprep.subr.bf16.mxu0 0
    %1746 = vmatpush1.bf16.msra.mxu0 %v1705
    %1747 = vmatprep.subr.bf16.mxu0 0
    %1748 = vmatpush1.bf16.msra.mxu0 %v1704
    %1749 = vmatprep.subr.bf16.mxu0 0
    %1750 = vmatpush1.bf16.msra.mxu0 %v1703
    %1751 = vmatprep.subr.bf16.mxu0 0
    %1752 = vmatpush2.bf16.msra.mxu0 %v1718
    %1753 = vmatprep.subr.bf16.mxu0 0
    %1754 = vmatpush2.bf16.msra.mxu0 %v1717
    %1755 = vmatprep.subr.bf16.mxu0 0
    %1756 = vmatpush2.bf16.msra.mxu0 %v1716
    %1757 = vmatprep.subr.bf16.mxu0 0
    %1758 = vmatpush2.bf16.msra.mxu0 %v1715
    %1759 = vmatprep.subr.bf16.mxu0 0
    %1760 = vmatpush2.bf16.msra.mxu0 %v1714
    %1761 = vmatprep.subr.bf16.mxu0 0
    %1762 = vmatpush2.bf16.msra.mxu0 %v1713
    %1763 = vmatprep.subr.bf16.mxu0 0
    %1764 = vmatpush2.bf16.msra.mxu0 %v1712
    %1765 = vmatprep.subr.bf16.mxu0 0
    %1766 = vmatpush2.bf16.msra.mxu0 %v1711
    %1767 = vmatprep.mubr.bf16.mxu0 %v1602
    %1768 = vmatmul.mubr.bf16.gmra.mxu0 %v1601
    %v1769 = vpop.f32.mrf.mxu0
    %v1770 = vadd.f32 %v1638, %v1769
    %v1771 = vpop.f32.mrf.mxu0
    %v1772 = vpop.f32.mrf.mxu0
    %v1773 = vpop.f32.mrf.mxu0
    %1774 = vdwg.mxu0
    %1775 = vmax.xlane.f32.xlu0 %v1770
    %v1776 = vpop.xlane.xlu0 %1775
    %v1777 = vsub.f32 %v1770, %v1776
    %v1778 = vmul.f32 %v1777, 1.442695
    %v1779 = vpow.pop %v1778
    %1780 = vadd.xlane.f32.xlu0 %v1779
    %v1781 = vpop.xlane.xlu0 %1780
    %v1782 = vlog2.pop %v1781
    %v1783 = vmul.f32 %v1782, 0.6931472
    %v1784 = vadd.f32 %v1783, %v1776
    %v1785 = vsub.f32 %v1770, %v1784
    %1786 = vst [vmem:[#allocation12] sm:$0xff] %v1785
    // Predicated region
    $region38: #{tpu_custom_call.1} parent=1 // pred_check
      _
    $region39: #{tpu_custom_call.1} parent=1 // pred_check_branch
      %1788 = sbr.rel (0) target = $region41
    $region40: #{tpu_custom_call.1} parent=1 // pred_region
      %s1790 = ssub.s32 128, 128
      %1791 = vsyncadd [#allocation8], %s1790
      %s1793 = sshll.u32 [#allocation12], 4
      %s1794 = int_to_ptr.vmem [resolvable:$true] %s1793
      %1796 = dma.vmem_to_hbm [thread:$0]  %s1794, 128, %s6, [#allocation8]
    $region41: #{tpu_custom_call.1} parent=1 // pred_fallthru
      _
    // Predicated region
    $region42: #{tpu_custom_call.1} parent=1 // pred_check
      _
    $region43: #{tpu_custom_call.1} parent=1 // pred_check_branch
      %1798 = sbr.rel (0) target = $region45
    $region44: #{tpu_custom_call.1} parent=1 // pred_region
      %1799 = dma.done [#allocation8], 128
    $region45: #{tpu_custom_call.1} parent=1 // pred_fallthru
      _
    %1800 = vsyncpa [#allocation7], 1
    %1801 = vsyncpa [#allocation10], 1
    %1802 = vsyncpa [#allocation8], 1
  %1803 = vsyncmov [#allocation5]
  %s1804 = vpop.sfrf %1803
  %p1805 = scmp.eq.s32.totalorder %s1804, 0
  %p1806 = pneg %p1805
  %1808 = shalt.err (%p1806)
  %s1809 = scalar_lea.sflag [#allocation5], 1
  %1810 = vsyncmov %s1809
  %s1811 = vpop.sfrf %1810
  %p1812 = scmp.eq.s32.totalorder %s1811, 0
  %p1813 = pneg %p1812
  %1815 = shalt.err (%p1813)
  %s1816 = scalar_lea.sflag [#allocation5], 2
  %1817 = vsyncmov %s1816
  %s1818 = vpop.sfrf %1817
  %p1819 = scmp.eq.s32.totalorder %s1818, 0
  %p1820 = pneg %p1819
  %1822 = shalt.err (%p1820)

</llo_original>
